<compile_context>
chip_gen: v6e
topology: v6e:2x2x1
jax: 0.10.0
libtpu: 0.0.40
codegen_flags: <defaults>
</compile_context>

<pallas_src>
import jax
import jax.numpy as jnp
import numpy as np
from jax import lax
from jax.experimental import pallas as pl
from jax.experimental.pallas import tpu as pltpu

NETWORK_CHANNELS = 64
LATENT_STEPS = 4     # Linear produces 64*4, viewed as (C, 4)
OUT_STEPS = 32       # after three nearest-upsample(x2) stages


def _round_up(n, m):
    return ((n + m - 1) // m) * m


def _leaky_relu(y):
    # max(y, 0.2*y) == LeakyReLU(0.2); one VALU op fewer than cmp+select.
    return jnp.maximum(y, 0.2 * y)


def expander_kernel(x_ref, wf1_ref, bf1_ref, w2_ref, b2_ref, w3_ref, b3_ref,
                    wfb_ref, bfb_ref, out_ref, g1_ref, g2_ref):
    tb = x_ref.shape[0]
    C2 = 2 * NETWORK_CHANNELS            # lane width of every pair-packed activation
    zero_blk = jnp.zeros((tb, C2), jnp.bfloat16)

    # Guard rows (tb zero rows at each end of each scratch buffer) implement the conv's zero
    # padding.  Re-zero every step: cheap, and safe under megacore grid sharding.
    g1_ref[0:tb] = zero_blk
    g1_ref[5 * tb:6 * tb] = zero_blk
    g2_ref[0:tb] = zero_blk
    g2_ref[9 * tb:10 * tb] = zero_blk

    # ---- fold(Linear(64->256) o Upsample(x2) o Conv1d(k=3,p=1)): ONE (tb,64)x(64,512) dot
    # that emits all 8 stage-1 time steps, pair-packed on lanes. -----------------------------
    x = x_ref[...].astype(jnp.bfloat16)
    y1 = jnp.dot(x, wf1_ref[...], preferred_element_type=jnp.float32) + bf1_ref[...]
    y1 = _leaky_relu(y1).astype(jnp.bfloat16)         # (tb, 512) = 4 pair-rows x 128 lanes
    for s in range(LATENT_STEPS):                     # vreg-aligned lane slices -> scratch rows
        g1_ref[(s + 1) * tb:(s + 2) * tb] = y1[:, s * C2:(s + 1) * C2]

    def conv_stage(g_ref, n_rows, w_ref, b_ref):
        """Fused Upsample(x2)+Conv1d(3,p=1)+LeakyReLU on pair-packed rows.

        g_ref holds n_rows pair-rows (rows tb..(n_rows+1)*tb) with zero guards at both ends.
        Returns (even, odd) output pair-row groups, each (n_rows*tb, 128) bf16:
          even[s] = output pair-row 2s, odd[s] = output pair-row 2s+1.
        """
        m = n_rows * tb
        prev = g_ref[0:m]                  # in_row[s-1]  (top guard = zero pad)
        cur = g_ref[tb:tb + m]             # in_row[s]
        nxt = g_ref[2 * tb:2 * tb + m]     # in_row[s+1]  (bottom guard = zero pad)
        b = b_ref[...]
        e = jnp.dot(prev, w_ref[0], preferred_element_type=jnp.float32)
        e = e + jnp.dot(cur, w_ref[1], preferred_element_type=jnp.float32)
        o = jnp.dot(cur, w_ref[2], preferred_element_type=jnp.float32)
        o = o + jnp.dot(nxt, w_ref[3], preferred_element_type=jnp.float32)
        e = _leaky_relu(e + b).astype(jnp.bfloat16)
        o = _leaky_relu(o + b).astype(jnp.bfloat16)
        return e, o

    # ---- stage 2: 8 -> 16 time steps.  Interleave = strided tb-row stores into scratch. ----
    e2, o2 = conv_stage(g1_ref, 4, w2_ref, b2_ref)
    for s in range(4):
        g2_ref[(2 * s + 1) * tb:(2 * s + 2) * tb] = e2[s * tb:(s + 1) * tb]
        g2_ref[(2 * s + 2) * tb:(2 * s + 3) * tb] = o2[s * tb:(s + 1) * tb]

    # ---- stage 3: 16 -> 32 time steps, kept as even/odd pair-row groups. --------------------
    e3, o3 = conv_stage(g2_ref, 8, w3_ref, b3_ref)

    # ---- final Conv1d(64,64,1) as block-diagonal (128,128) matmul, stored straight into the
    # lane-dense bf16 output block (no concat, no f32 writeback). -----------------------------
    wfb = wfb_ref[...]
    bfb = bfb_ref[...]
    m3 = 8 * tb
    out_ref[0:m3] = (jnp.dot(e3, wfb, preferred_element_type=jnp.float32)
                     + bfb).astype(out_ref.dtype)
    out_ref[m3:2 * m3] = (jnp.dot(o3, wfb, preferred_element_type=jnp.float32)
                          + bfb).astype(out_ref.dtype)


def _prep_params(params):
    """Re-layout / compose PyTorch parameters for the pair-packed bf16 kernel (compose in f32)."""
    C = NETWORK_CHANNELS
    f32 = jnp.float32
    (w0, b0), (w1, b1), (w2, b2), (w3, b3), (wf, bf) = params

    # Initial Linear, time-major: l[s] = x @ A[s] + a[s]   (torch out index = channel*4 + step)
    A = jnp.transpose(w0.reshape(C, LATENT_STEPS, C).astype(f32), (1, 2, 0))   # (4, Cin, Cout)
    a = b0.reshape(C, LATENT_STEPS).T.astype(f32)                              # (4, Cout)

    def taps(w):
        wt = jnp.transpose(w.astype(f32), (2, 1, 0))      # (3, Cin, Cout) time-major taps
        return wt[0], wt[0] + wt[1], wt[1] + wt[2], wt[2]  # W0, W01, W12, W2

    # ---- fold Linear + stage-1: pair s -> [time 2s | time 2s+1], weight (64, 4*128) ---------
    W0t, W01t, W12t, W2t = taps(w1)
    b1f = b1.astype(f32)
    Az = jnp.zeros((1, C, C), f32)
    az = jnp.zeros((1, C), f32)
    A_ext = jnp.concatenate([Az, A, Az], axis=0)           # A_ext[s+1] == A[s]
    a_ext = jnp.concatenate([az, a, az], axis=0)
    cols, bias_cols = [], []
    for s in range(LATENT_STEPS):
        we = A_ext[s] @ W0t + A_ext[s + 1] @ W12t          # even half: out time 2s
        wo = A_ext[s + 1] @ W01t + A_ext[s + 2] @ W2t      # odd half:  out time 2s+1
        be = a_ext[s] @ W0t + a_ext[s + 1] @ W12t + b1f
        bo = a_ext[s + 1] @ W01t + a_ext[s + 2] @ W2t + b1f
        cols.append(jnp.concatenate([we, wo], axis=1))     # (64, 128)
        bias_cols.append(jnp.concatenate([be, bo]))        # (128,)
    wf1 = jnp.concatenate(cols, axis=1).astype(jnp.bfloat16)                 # (64, 512)
    bf1 = jnp.concatenate(bias_cols).reshape(1, LATENT_STEPS * 2 * C).astype(f32)

    def pair_blocks(w, b):
        # Block weights acting on pair-packed rows r=[h0|h1]:
        #   even out-row 2s = in_row[s-1] @ PA + in_row[s] @ PB
        #   odd  out-row 2s+1 = in_row[s] @ PC + in_row[s+1] @ PD
        W0t, W01t, W12t, W2t = taps(w)
        Z = jnp.zeros((C, C), f32)
        PA = jnp.block([[Z, Z], [W0t, Z]])
        PB = jnp.block([[W12t, W01t], [Z, W2t]])
        PC = jnp.block([[W0t, Z], [W12t, W01t]])
        PD = jnp.block([[Z, W2t], [Z, Z]])
        Wp = jnp.stack([PA, PB, PC, PD]).astype(jnp.bfloat16)                # (4, 128, 128)
        bp = jnp.concatenate([b, b]).reshape(1, 2 * C).astype(f32)           # (1, 128)
        return Wp, bp

    w2p, b2p = pair_blocks(w2, b2)
    w3p, b3p = pair_blocks(w3, b3)

    Wff = wf[:, :, 0].T.astype(f32)                                          # (Cin, Cout)
    Z = jnp.zeros((C, C), f32)
    wfb = jnp.block([[Wff, Z], [Z, Wff]]).astype(jnp.bfloat16)               # (128, 128)
    bfb = jnp.concatenate([bf, bf]).reshape(1, 2 * C).astype(f32)
    return wf1, bf1, w2p, b2p, w3p, b3p, wfb, bfb


def expander_forward(x, params, block_batch=256):
    """Forward matching the PyTorch Expander: (..., 64) latents -> (B, 64, 32)."""
    C = NETWORK_CHANNELS
    x = x.reshape(-1, C).astype(jnp.float32)                  # torch: x.view(-1, 64)
    B = x.shape[0]

    # Batch tile: multiple of 16 (bf16 sublane tile), sized so the grid has >=2 steps when B
    # allows it (v7x dual-TC sharding).  block_batch=256 keeps the per-step footprint a few MiB;
    # raise block_batch (plus vmem_limit_bytes, handled below) on v5e/v6e for very large B.
    tb_cap = _round_up(block_batch, 16)
    tb = max(16, min(tb_cap, _round_up(pl.cdiv(B, 2), 16)))
    b_pad = _round_up(B, tb)
    nb = b_pad // tb
    if b_pad != B:
        # Padded batch rows compute bias-propagated garbage that is sliced off below -- harmless.
        x = jnp.pad(x, ((0, b_pad - B), (0, 0)))

    wf1, bf1, w2p, b2p, w3p, b3p, wfb, bfb = _prep_params(params)

    def _const_spec(shape):
        zeros = (0,) * len(shape)
        return pl.BlockSpec(shape, lambda j, _z=zeros: _z)

    in_specs = [
        pl.BlockSpec((tb, C), lambda j: (j, 0)),              # latent block, per batch tile
        _const_spec(wf1.shape), _const_spec(bf1.shape),       # folded Linear+stage1
        _const_spec(w2p.shape), _const_spec(b2p.shape),       # stage 2 block weights
        _const_spec(w3p.shape), _const_spec(b3p.shape),       # stage 3 block weights
        _const_spec(wfb.shape), _const_spec(bfb.shape),       # final block-diag 1x1
    ]
    out_specs = pl.BlockSpec((16 * tb, 2 * C), lambda j: (j, 0))

    macs_per_elem = (C * 8 * C                                # folded Linear+stage1
                     + 4 * 4 * (2 * C) * (2 * C)              # stage 2
                     + 8 * 4 * (2 * C) * (2 * C)              # stage 3
                     + 16 * (2 * C) * (2 * C))                # final 1x1 (block-diag)
    cost = pl.CostEstimate(
        flops=int(2 * b_pad * macs_per_elem),
        transcendentals=0,
        bytes_accessed=int(b_pad * (C * 4 + OUT_STEPS * C * 2) + 800_000))

    out = pl.pallas_call(
        expander_kernel,
        grid=(nb,),
        in_specs=in_specs,
        out_specs=out_specs,
        out_shape=jax.ShapeDtypeStruct((nb * 16 * tb, 2 * C), jnp.bfloat16),
        scratch_shapes=[pltpu.VMEM((6 * tb, 2 * C), jnp.bfloat16),    # stage-2 input + guards
                        pltpu.VMEM((10 * tb, 2 * C), jnp.bfloat16)],  # stage-3 input + guards
        compiler_params=pltpu.CompilerParams(
            dimension_semantics=("parallel",),
            vmem_limit_bytes=(96 << 20) if tb > 256 else None),
        cost_estimate=cost,
    )(x, wf1, bf1, w2p, b2p, w3p, b3p, wfb, bfb)

    # Decode (pure layout): out row = j*16*tb + g*8*tb + s3*tb + b_local, lane = p*64 + c
    #   <=> batch j*tb + b_local, time 4*s3 + 2*g + p, channel c  ->  PyTorch NCL (B, 64, 32).
    r = out.astype(jnp.float32).reshape(nb, 2, 8, tb, 2, C)
    r = jnp.transpose(r, (0, 3, 5, 2, 1, 4)).reshape(b_pad, C, OUT_STEPS)
    return r[:B]


# ---------------- deterministic parameter init (PyTorch-default-like) -------
def init_params(key):
    C = NETWORK_CHANNELS
    ks = jax.random.split(key, 10)

    def lin(kw, kb, out_f, in_f):
        bound = 1.0 / np.sqrt(in_f)
        w = jax.random.uniform(kw, (out_f, in_f), jnp.float32, -bound, bound)
        b = jax.random.uniform(kb, (out_f,), jnp.float32, -bound, bound)
        return w, b

    def conv(kw, kb, out_c, in_c, k):
        bound = 1.0 / np.sqrt(in_c * k)
        w = jax.random.uniform(kw, (out_c, in_c, k), jnp.float32, -bound, bound)
        b = jax.random.uniform(kb, (out_c,), jnp.float32, -bound, bound)
        return w, b

    return (lin(ks[0], ks[1], C * LATENT_STEPS, C),
            conv(ks[2], ks[3], C, C, 3),
            conv(ks[4], ks[5], C, C, 3),
            conv(ks[6], ks[7], C, C, 3),
            conv(ks[8], ks[9], C, C, 1))


# ---------------- pure-JAX reference (mirrors the PyTorch forward) ----------
def expander_reference(x, params):
    C = NETWORK_CHANNELS
    (w0, b0), (w1, b1), (w2, b2), (w3, b3), (wf, bf) = params
    x = x.reshape(-1, C)
    h = jnp.dot(x, w0.T, precision=lax.Precision.HIGHEST) + b0   # (B, 4C)
    h = h.reshape(-1, C, LATENT_STEPS)                           # (B, C, 4)

    def conv1d(z, w, b, pad):
        y = lax.conv_general_dilated(
            z, w, window_strides=(1,), padding=((pad, pad),),
            dimension_numbers=("NCH", "OIH", "NCH"),
            precision=lax.Precision.HIGHEST)
        return y + b[None, :, None]

    lrelu = lambda z: jnp.where(z > 0, z, 0.2 * z)

    for (w, b) in ((w1, b1), (w2, b2), (w3, b3)):
        h = jnp.repeat(h, 2, axis=-1)          # Upsample(scale=2, nearest)
        h = lrelu(conv1d(h, w, b, pad=1))
    return conv1d(h, wf, bf, pad=0)


if __name__ == "__main__":
    key = jax.random.PRNGKey(0)
    pkey, xkey = jax.random.split(key)
    params = init_params(pkey)
    x = jax.random.normal(xkey, (2, NETWORK_CHANNELS), jnp.float32)   # batch=2 latents

    out = expander_forward(x, params)
    out = jax.block_until_ready(out)
    assert out.shape == (2, NETWORK_CHANNELS, OUT_STEPS), out.shape

    ref = expander_reference(x, params)
    # bf16 MXU operands + bf16 inter-stage activations + bf16 output, f32 accumulation.
    np.testing.assert_allclose(np.asarray(out), np.asarray(ref), rtol=2.5e-2, atol=2.5e-2)
    print("KERNEL_OK")
</pallas_src>

<mosaic_0001>
module attributes {stable_mosaic.version = 11 : i64} {
  func.func @expander_kernel(%arg0: i32, %arg1: memref<16x64xf32, #tpu.memory_space<vmem>>, %arg2: memref<64x512xbf16, #tpu.memory_space<vmem>>, %arg3: memref<1x512xf32, #tpu.memory_space<vmem>>, %arg4: memref<4x128x128xbf16, #tpu.memory_space<vmem>>, %arg5: memref<1x128xf32, #tpu.memory_space<vmem>>, %arg6: memref<4x128x128xbf16, #tpu.memory_space<vmem>>, %arg7: memref<1x128xf32, #tpu.memory_space<vmem>>, %arg8: memref<128x128xbf16, #tpu.memory_space<vmem>>, %arg9: memref<1x128xf32, #tpu.memory_space<vmem>>, %arg10: memref<256x128xbf16, #tpu.memory_space<vmem>>, %arg11: memref<96x128xbf16, #tpu.memory_space<vmem>>, %arg12: memref<160x128xbf16, #tpu.memory_space<vmem>>) attributes {dimension_semantics = [#tpu.dimension_semantics<parallel>], iteration_bounds = array<i64: 1>, scalar_prefetch = 0 : i64, scratch_operands = 2 : i64, tpu.core_type = #tpu.core_type<tc>, window_params = [{transform_indices = @transform_0, window_bounds = array<i64: 16, 64>}, {pipeline_mode = #tpu.pipeline_mode<synchronous>, transform_indices = @transform_1, window_bounds = array<i64: 64, 512>}, {pipeline_mode = #tpu.pipeline_mode<synchronous>, transform_indices = @transform_2, window_bounds = array<i64: 1, 512>}, {pipeline_mode = #tpu.pipeline_mode<synchronous>, transform_indices = @transform_3, window_bounds = array<i64: 4, 128, 128>}, {pipeline_mode = #tpu.pipeline_mode<synchronous>, transform_indices = @transform_4, window_bounds = array<i64: 1, 128>}, {pipeline_mode = #tpu.pipeline_mode<synchronous>, transform_indices = @transform_5, window_bounds = array<i64: 4, 128, 128>}, {pipeline_mode = #tpu.pipeline_mode<synchronous>, transform_indices = @transform_6, window_bounds = array<i64: 1, 128>}, {pipeline_mode = #tpu.pipeline_mode<synchronous>, transform_indices = @transform_7, window_bounds = array<i64: 128, 128>}, {pipeline_mode = #tpu.pipeline_mode<synchronous>, transform_indices = @transform_8, window_bounds = array<i64: 1, 128>}, {transform_indices = @transform_9, window_bounds = array<i64: 256, 128>}]} {
    %cst = arith.constant 0.000000e+00 : bf16
    %0 = vector.broadcast %cst : bf16 to vector<16x128xbf16>
    %c0 = arith.constant 0 : index
    %c0_0 = arith.constant 0 : index
    %1 = vector.load %arg11[%c0, %c0_0] : memref<96x128xbf16, #tpu.memory_space<vmem>>, vector<16x128xbf16>
    tpu.vector_store %arg11[%c0, %c0_0], %0 {strides = array<i32>} : memref<96x128xbf16, #tpu.memory_space<vmem>>, vector<16x128xbf16>,
    %c80 = arith.constant 80 : index
    %c0_1 = arith.constant 0 : index
    %2 = vector.load %arg11[%c80, %c0_1] : memref<96x128xbf16, #tpu.memory_space<vmem>>, vector<16x128xbf16>
    tpu.vector_store %arg11[%c80, %c0_1], %0 {strides = array<i32>} : memref<96x128xbf16, #tpu.memory_space<vmem>>, vector<16x128xbf16>,
    %c0_2 = arith.constant 0 : index
    %c0_3 = arith.constant 0 : index
    %3 = vector.load %arg12[%c0_2, %c0_3] : memref<160x128xbf16, #tpu.memory_space<vmem>>, vector<16x128xbf16>
    tpu.vector_store %arg12[%c0_2, %c0_3], %0 {strides = array<i32>} : memref<160x128xbf16, #tpu.memory_space<vmem>>, vector<16x128xbf16>,
    %c144 = arith.constant 144 : index
    %c0_4 = arith.constant 0 : index
    %4 = vector.load %arg12[%c144, %c0_4] : memref<160x128xbf16, #tpu.memory_space<vmem>>, vector<16x128xbf16>
    tpu.vector_store %arg12[%c144, %c0_4], %0 {strides = array<i32>} : memref<160x128xbf16, #tpu.memory_space<vmem>>, vector<16x128xbf16>,
    %c0_5 = arith.constant 0 : index
    %c0_6 = arith.constant 0 : index
    %5 = vector.load %arg1[%c0_5, %c0_6] : memref<16x64xf32, #tpu.memory_space<vmem>>, vector<16x64xf32>
    %6 = arith.truncf %5 : vector<16x64xf32> to vector<16x64xbf16>
    %c0_7 = arith.constant 0 : index
    %c0_8 = arith.constant 0 : index
    %7 = vector.load %arg2[%c0_7, %c0_8] : memref<64x512xbf16, #tpu.memory_space<vmem>>, vector<64x512xbf16>
    %cst_9 = arith.constant dense<0.000000e+00> : vector<16x512xf32>
    %8 = tpu.matmul %6, %7, %cst_9 {dimension_numbers = #tpu.dot_dimension_numbers<[1], [0], [0], [1], [0, 0, 1, 1], [], []>} : vector<16x64xbf16>, vector<64x512xbf16>, vector<16x512xf32> -> vector<16x512xf32>
    %c0_10 = arith.constant 0 : index
    %c0_11 = arith.constant 0 : index
    %9 = vector.load %arg3[%c0_10, %c0_11] : memref<1x512xf32, #tpu.memory_space<vmem>>, vector<1x512xf32>
    %10 = vector.broadcast %9 : vector<1x512xf32> to vector<16x512xf32>
    %11 = arith.addf %8, %10 : vector<16x512xf32>
    %cst_12 = arith.constant 2.000000e-01 : f32
    %12 = vector.broadcast %cst_12 : f32 to vector<16x512xf32>
    %13 = arith.mulf %12, %11 : vector<16x512xf32>
    %14 = arith.maximumf %11, %13 : vector<16x512xf32>
    %15 = arith.truncf %14 : vector<16x512xf32> to vector<16x512xbf16>
    %16 = vector.extract_strided_slice %15 {offsets = [0, 0], sizes = [16, 128], strides = [1, 1]} : vector<16x512xbf16> to vector<16x128xbf16>
    %c16 = arith.constant 16 : index
    %c0_13 = arith.constant 0 : index
    %17 = vector.load %arg11[%c16, %c0_13] : memref<96x128xbf16, #tpu.memory_space<vmem>>, vector<16x128xbf16>
    tpu.vector_store %arg11[%c16, %c0_13], %16 {strides = array<i32>} : memref<96x128xbf16, #tpu.memory_space<vmem>>, vector<16x128xbf16>,
    %18 = vector.extract_strided_slice %15 {offsets = [0, 128], sizes = [16, 128], strides = [1, 1]} : vector<16x512xbf16> to vector<16x128xbf16>
    %c32 = arith.constant 32 : index
    %c0_14 = arith.constant 0 : index
    %19 = vector.load %arg11[%c32, %c0_14] : memref<96x128xbf16, #tpu.memory_space<vmem>>, vector<16x128xbf16>
    tpu.vector_store %arg11[%c32, %c0_14], %18 {strides = array<i32>} : memref<96x128xbf16, #tpu.memory_space<vmem>>, vector<16x128xbf16>,
    %20 = vector.extract_strided_slice %15 {offsets = [0, 256], sizes = [16, 128], strides = [1, 1]} : vector<16x512xbf16> to vector<16x128xbf16>
    %c48 = arith.constant 48 : index
    %c0_15 = arith.constant 0 : index
    %21 = vector.load %arg11[%c48, %c0_15] : memref<96x128xbf16, #tpu.memory_space<vmem>>, vector<16x128xbf16>
    tpu.vector_store %arg11[%c48, %c0_15], %20 {strides = array<i32>} : memref<96x128xbf16, #tpu.memory_space<vmem>>, vector<16x128xbf16>,
    %22 = vector.extract_strided_slice %15 {offsets = [0, 384], sizes = [16, 128], strides = [1, 1]} : vector<16x512xbf16> to vector<16x128xbf16>
    %c64 = arith.constant 64 : index
    %c0_16 = arith.constant 0 : index
    %23 = vector.load %arg11[%c64, %c0_16] : memref<96x128xbf16, #tpu.memory_space<vmem>>, vector<16x128xbf16>
    tpu.vector_store %arg11[%c64, %c0_16], %22 {strides = array<i32>} : memref<96x128xbf16, #tpu.memory_space<vmem>>, vector<16x128xbf16>,
    %c0_17 = arith.constant 0 : index
    %c0_18 = arith.constant 0 : index
    %24 = vector.load %arg11[%c0_17, %c0_18] : memref<96x128xbf16, #tpu.memory_space<vmem>>, vector<64x128xbf16>
    %c16_19 = arith.constant 16 : index
    %c0_20 = arith.constant 0 : index
    %25 = vector.load %arg11[%c16_19, %c0_20] : memref<96x128xbf16, #tpu.memory_space<vmem>>, vector<64x128xbf16>
    %c32_21 = arith.constant 32 : index
    %c0_22 = arith.constant 0 : index
    %26 = vector.load %arg11[%c32_21, %c0_22] : memref<96x128xbf16, #tpu.memory_space<vmem>>, vector<64x128xbf16>
    %c0_23 = arith.constant 0 : index
    %c0_24 = arith.constant 0 : index
    %27 = vector.load %arg5[%c0_23, %c0_24] : memref<1x128xf32, #tpu.memory_space<vmem>>, vector<1x128xf32>
    %c0_25 = arith.constant 0 : index
    %c0_26 = arith.constant 0 : index
    %c0_27 = arith.constant 0 : index
    %28 = vector.load %arg4[%c0_25, %c0_26, %c0_27] : memref<4x128x128xbf16, #tpu.memory_space<vmem>>, vector<1x128x128xbf16>
    %29 = vector.shape_cast %28 : vector<1x128x128xbf16> to vector<128x128xbf16>
    %cst_28 = arith.constant dense<0.000000e+00> : vector<64x128xf32>
    %30 = tpu.matmul %24, %29, %cst_28 {dimension_numbers = #tpu.dot_dimension_numbers<[1], [0], [0], [1], [0, 0, 1, 1], [], []>} : vector<64x128xbf16>, vector<128x128xbf16>, vector<64x128xf32> -> vector<64x128xf32>
    %c1 = arith.constant 1 : index
    %c0_29 = arith.constant 0 : index
    %c0_30 = arith.constant 0 : index
    %31 = vector.load %arg4[%c1, %c0_29, %c0_30] : memref<4x128x128xbf16, #tpu.memory_space<vmem>>, vector<1x128x128xbf16>
    %32 = vector.shape_cast %31 : vector<1x128x128xbf16> to vector<128x128xbf16>
    %cst_31 = arith.constant dense<0.000000e+00> : vector<64x128xf32>
    %33 = tpu.matmul %25, %32, %cst_31 {dimension_numbers = #tpu.dot_dimension_numbers<[1], [0], [0], [1], [0, 0, 1, 1], [], []>} : vector<64x128xbf16>, vector<128x128xbf16>, vector<64x128xf32> -> vector<64x128xf32>
    %34 = arith.addf %30, %33 : vector<64x128xf32>
    %c2 = arith.constant 2 : index
    %c0_32 = arith.constant 0 : index
    %c0_33 = arith.constant 0 : index
    %35 = vector.load %arg4[%c2, %c0_32, %c0_33] : memref<4x128x128xbf16, #tpu.memory_space<vmem>>, vector<1x128x128xbf16>
    %36 = vector.shape_cast %35 : vector<1x128x128xbf16> to vector<128x128xbf16>
    %cst_34 = arith.constant dense<0.000000e+00> : vector<64x128xf32>
    %37 = tpu.matmul %25, %36, %cst_34 {dimension_numbers = #tpu.dot_dimension_numbers<[1], [0], [0], [1], [0, 0, 1, 1], [], []>} : vector<64x128xbf16>, vector<128x128xbf16>, vector<64x128xf32> -> vector<64x128xf32>
    %c3 = arith.constant 3 : index
    %c0_35 = arith.constant 0 : index
    %c0_36 = arith.constant 0 : index
    %38 = vector.load %arg4[%c3, %c0_35, %c0_36] : memref<4x128x128xbf16, #tpu.memory_space<vmem>>, vector<1x128x128xbf16>
    %39 = vector.shape_cast %38 : vector<1x128x128xbf16> to vector<128x128xbf16>
    %cst_37 = arith.constant dense<0.000000e+00> : vector<64x128xf32>
    %40 = tpu.matmul %26, %39, %cst_37 {dimension_numbers = #tpu.dot_dimension_numbers<[1], [0], [0], [1], [0, 0, 1, 1], [], []>} : vector<64x128xbf16>, vector<128x128xbf16>, vector<64x128xf32> -> vector<64x128xf32>
    %41 = arith.addf %37, %40 : vector<64x128xf32>
    %42 = vector.broadcast %27 : vector<1x128xf32> to vector<64x128xf32>
    %43 = arith.addf %34, %42 : vector<64x128xf32>
    %cst_38 = arith.constant 2.000000e-01 : f32
    %44 = vector.broadcast %cst_38 : f32 to vector<64x128xf32>
    %45 = arith.mulf %44, %43 : vector<64x128xf32>
    %46 = arith.maximumf %43, %45 : vector<64x128xf32>
    %47 = arith.truncf %46 : vector<64x128xf32> to vector<64x128xbf16>
    %48 = vector.broadcast %27 : vector<1x128xf32> to vector<64x128xf32>
    %49 = arith.addf %41, %48 : vector<64x128xf32>
    %cst_39 = arith.constant 2.000000e-01 : f32
    %50 = vector.broadcast %cst_39 : f32 to vector<64x128xf32>
    %51 = arith.mulf %50, %49 : vector<64x128xf32>
    %52 = arith.maximumf %49, %51 : vector<64x128xf32>
    %53 = arith.truncf %52 : vector<64x128xf32> to vector<64x128xbf16>
    %54 = vector.extract_strided_slice %47 {offsets = [0, 0], sizes = [16, 128], strides = [1, 1]} : vector<64x128xbf16> to vector<16x128xbf16>
    %c16_40 = arith.constant 16 : index
    %c0_41 = arith.constant 0 : index
    %55 = vector.load %arg12[%c16_40, %c0_41] : memref<160x128xbf16, #tpu.memory_space<vmem>>, vector<16x128xbf16>
    tpu.vector_store %arg12[%c16_40, %c0_41], %54 {strides = array<i32>} : memref<160x128xbf16, #tpu.memory_space<vmem>>, vector<16x128xbf16>,
    %56 = vector.extract_strided_slice %53 {offsets = [0, 0], sizes = [16, 128], strides = [1, 1]} : vector<64x128xbf16> to vector<16x128xbf16>
    %c32_42 = arith.constant 32 : index
    %c0_43 = arith.constant 0 : index
    %57 = vector.load %arg12[%c32_42, %c0_43] : memref<160x128xbf16, #tpu.memory_space<vmem>>, vector<16x128xbf16>
    tpu.vector_store %arg12[%c32_42, %c0_43], %56 {strides = array<i32>} : memref<160x128xbf16, #tpu.memory_space<vmem>>, vector<16x128xbf16>,
    %58 = vector.extract_strided_slice %47 {offsets = [16, 0], sizes = [16, 128], strides = [1, 1]} : vector<64x128xbf16> to vector<16x128xbf16>
    %c48_44 = arith.constant 48 : index
    %c0_45 = arith.constant 0 : index
    %59 = vector.load %arg12[%c48_44, %c0_45] : memref<160x128xbf16, #tpu.memory_space<vmem>>, vector<16x128xbf16>
    tpu.vector_store %arg12[%c48_44, %c0_45], %58 {strides = array<i32>} : memref<160x128xbf16, #tpu.memory_space<vmem>>, vector<16x128xbf16>,
    %60 = vector.extract_strided_slice %53 {offsets = [16, 0], sizes = [16, 128], strides = [1, 1]} : vector<64x128xbf16> to vector<16x128xbf16>
    %c64_46 = arith.constant 64 : index
    %c0_47 = arith.constant 0 : index
    %61 = vector.load %arg12[%c64_46, %c0_47] : memref<160x128xbf16, #tpu.memory_space<vmem>>, vector<16x128xbf16>
    tpu.vector_store %arg12[%c64_46, %c0_47], %60 {strides = array<i32>} : memref<160x128xbf16, #tpu.memory_space<vmem>>, vector<16x128xbf16>,
    %62 = vector.extract_strided_slice %47 {offsets = [32, 0], sizes = [16, 128], strides = [1, 1]} : vector<64x128xbf16> to vector<16x128xbf16>
    %c80_48 = arith.constant 80 : index
    %c0_49 = arith.constant 0 : index
    %63 = vector.load %arg12[%c80_48, %c0_49] : memref<160x128xbf16, #tpu.memory_space<vmem>>, vector<16x128xbf16>
    tpu.vector_store %arg12[%c80_48, %c0_49], %62 {strides = array<i32>} : memref<160x128xbf16, #tpu.memory_space<vmem>>, vector<16x128xbf16>,
    %64 = vector.extract_strided_slice %53 {offsets = [32, 0], sizes = [16, 128], strides = [1, 1]} : vector<64x128xbf16> to vector<16x128xbf16>
    %c96 = arith.constant 96 : index
    %c0_50 = arith.constant 0 : index
    %65 = vector.load %arg12[%c96, %c0_50] : memref<160x128xbf16, #tpu.memory_space<vmem>>, vector<16x128xbf16>
    tpu.vector_store %arg12[%c96, %c0_50], %64 {strides = array<i32>} : memref<160x128xbf16, #tpu.memory_space<vmem>>, vector<16x128xbf16>,
    %66 = vector.extract_strided_slice %47 {offsets = [48, 0], sizes = [16, 128], strides = [1, 1]} : vector<64x128xbf16> to vector<16x128xbf16>
    %c112 = arith.constant 112 : index
    %c0_51 = arith.constant 0 : index
    %67 = vector.load %arg12[%c112, %c0_51] : memref<160x128xbf16, #tpu.memory_space<vmem>>, vector<16x128xbf16>
    tpu.vector_store %arg12[%c112, %c0_51], %66 {strides = array<i32>} : memref<160x128xbf16, #tpu.memory_space<vmem>>, vector<16x128xbf16>,
    %68 = vector.extract_strided_slice %53 {offsets = [48, 0], sizes = [16, 128], strides = [1, 1]} : vector<64x128xbf16> to vector<16x128xbf16>
    %c128 = arith.constant 128 : index
    %c0_52 = arith.constant 0 : index
    %69 = vector.load %arg12[%c128, %c0_52] : memref<160x128xbf16, #tpu.memory_space<vmem>>, vector<16x128xbf16>
    tpu.vector_store %arg12[%c128, %c0_52], %68 {strides = array<i32>} : memref<160x128xbf16, #tpu.memory_space<vmem>>, vector<16x128xbf16>,
    %c0_53 = arith.constant 0 : index
    %c0_54 = arith.constant 0 : index
    %70 = vector.load %arg12[%c0_53, %c0_54] : memref<160x128xbf16, #tpu.memory_space<vmem>>, vector<128x128xbf16>
    %c16_55 = arith.constant 16 : index
    %c0_56 = arith.constant 0 : index
    %71 = vector.load %arg12[%c16_55, %c0_56] : memref<160x128xbf16, #tpu.memory_space<vmem>>, vector<128x128xbf16>
    %c32_57 = arith.constant 32 : index
    %c0_58 = arith.constant 0 : index
    %72 = vector.load %arg12[%c32_57, %c0_58] : memref<160x128xbf16, #tpu.memory_space<vmem>>, vector<128x128xbf16>
    %c0_59 = arith.constant 0 : index
    %c0_60 = arith.constant 0 : index
    %73 = vector.load %arg7[%c0_59, %c0_60] : memref<1x128xf32, #tpu.memory_space<vmem>>, vector<1x128xf32>
    %c0_61 = arith.constant 0 : index
    %c0_62 = arith.constant 0 : index
    %c0_63 = arith.constant 0 : index
    %74 = vector.load %arg6[%c0_61, %c0_62, %c0_63] : memref<4x128x128xbf16, #tpu.memory_space<vmem>>, vector<1x128x128xbf16>
    %75 = vector.shape_cast %74 : vector<1x128x128xbf16> to vector<128x128xbf16>
    %cst_64 = arith.constant dense<0.000000e+00> : vector<128x128xf32>
    %76 = tpu.matmul %70, %75, %cst_64 {dimension_numbers = #tpu.dot_dimension_numbers<[1], [0], [0], [1], [0, 0, 1, 1], [], []>} : vector<128x128xbf16>, vector<128x128xbf16>, vector<128x128xf32> -> vector<128x128xf32>
    %c1_65 = arith.constant 1 : index
    %c0_66 = arith.constant 0 : index
    %c0_67 = arith.constant 0 : index
    %77 = vector.load %arg6[%c1_65, %c0_66, %c0_67] : memref<4x128x128xbf16, #tpu.memory_space<vmem>>, vector<1x128x128xbf16>
    %78 = vector.shape_cast %77 : vector<1x128x128xbf16> to vector<128x128xbf16>
    %cst_68 = arith.constant dense<0.000000e+00> : vector<128x128xf32>
    %79 = tpu.matmul %71, %78, %cst_68 {dimension_numbers = #tpu.dot_dimension_numbers<[1], [0], [0], [1], [0, 0, 1, 1], [], []>} : vector<128x128xbf16>, vector<128x128xbf16>, vector<128x128xf32> -> vector<128x128xf32>
    %80 = arith.addf %76, %79 : vector<128x128xf32>
    %c2_69 = arith.constant 2 : index
    %c0_70 = arith.constant 0 : index
    %c0_71 = arith.constant 0 : index
    %81 = vector.load %arg6[%c2_69, %c0_70, %c0_71] : memref<4x128x128xbf16, #tpu.memory_space<vmem>>, vector<1x128x128xbf16>
    %82 = vector.shape_cast %81 : vector<1x128x128xbf16> to vector<128x128xbf16>
    %cst_72 = arith.constant dense<0.000000e+00> : vector<128x128xf32>
    %83 = tpu.matmul %71, %82, %cst_72 {dimension_numbers = #tpu.dot_dimension_numbers<[1], [0], [0], [1], [0, 0, 1, 1], [], []>} : vector<128x128xbf16>, vector<128x128xbf16>, vector<128x128xf32> -> vector<128x128xf32>
    %c3_73 = arith.constant 3 : index
    %c0_74 = arith.constant 0 : index
    %c0_75 = arith.constant 0 : index
    %84 = vector.load %arg6[%c3_73, %c0_74, %c0_75] : memref<4x128x128xbf16, #tpu.memory_space<vmem>>, vector<1x128x128xbf16>
    %85 = vector.shape_cast %84 : vector<1x128x128xbf16> to vector<128x128xbf16>
    %cst_76 = arith.constant dense<0.000000e+00> : vector<128x128xf32>
    %86 = tpu.matmul %72, %85, %cst_76 {dimension_numbers = #tpu.dot_dimension_numbers<[1], [0], [0], [1], [0, 0, 1, 1], [], []>} : vector<128x128xbf16>, vector<128x128xbf16>, vector<128x128xf32> -> vector<128x128xf32>
    %87 = arith.addf %83, %86 : vector<128x128xf32>
    %88 = vector.broadcast %73 : vector<1x128xf32> to vector<128x128xf32>
    %89 = arith.addf %80, %88 : vector<128x128xf32>
    %cst_77 = arith.constant 2.000000e-01 : f32
    %90 = vector.broadcast %cst_77 : f32 to vector<128x128xf32>
    %91 = arith.mulf %90, %89 : vector<128x128xf32>
    %92 = arith.maximumf %89, %91 : vector<128x128xf32>
    %93 = arith.truncf %92 : vector<128x128xf32> to vector<128x128xbf16>
    %94 = vector.broadcast %73 : vector<1x128xf32> to vector<128x128xf32>
    %95 = arith.addf %87, %94 : vector<128x128xf32>
    %cst_78 = arith.constant 2.000000e-01 : f32
    %96 = vector.broadcast %cst_78 : f32 to vector<128x128xf32>
    %97 = arith.mulf %96, %95 : vector<128x128xf32>
    %98 = arith.maximumf %95, %97 : vector<128x128xf32>
    %99 = arith.truncf %98 : vector<128x128xf32> to vector<128x128xbf16>
    %c0_79 = arith.constant 0 : index
    %c0_80 = arith.constant 0 : index
    %100 = vector.load %arg8[%c0_79, %c0_80] : memref<128x128xbf16, #tpu.memory_space<vmem>>, vector<128x128xbf16>
    %c0_81 = arith.constant 0 : index
    %c0_82 = arith.constant 0 : index
    %101 = vector.load %arg9[%c0_81, %c0_82] : memref<1x128xf32, #tpu.memory_space<vmem>>, vector<1x128xf32>
    %cst_83 = arith.constant dense<0.000000e+00> : vector<128x128xf32>
    %102 = tpu.matmul %93, %100, %cst_83 {dimension_numbers = #tpu.dot_dimension_numbers<[1], [0], [0], [1], [0, 0, 1, 1], [], []>} : vector<128x128xbf16>, vector<128x128xbf16>, vector<128x128xf32> -> vector<128x128xf32>
    %103 = vector.broadcast %101 : vector<1x128xf32> to vector<128x128xf32>
    %104 = arith.addf %102, %103 : vector<128x128xf32>
    %105 = arith.truncf %104 : vector<128x128xf32> to vector<128x128xbf16>
    %c0_84 = arith.constant 0 : index
    %c0_85 = arith.constant 0 : index
    %106 = vector.load %arg10[%c0_84, %c0_85] : memref<256x128xbf16, #tpu.memory_space<vmem>>, vector<128x128xbf16>
    tpu.vector_store %arg10[%c0_84, %c0_85], %105 {strides = array<i32>} : memref<256x128xbf16, #tpu.memory_space<vmem>>, vector<128x128xbf16>,
    %cst_86 = arith.constant dense<0.000000e+00> : vector<128x128xf32>
    %107 = tpu.matmul %99, %100, %cst_86 {dimension_numbers = #tpu.dot_dimension_numbers<[1], [0], [0], [1], [0, 0, 1, 1], [], []>} : vector<128x128xbf16>, vector<128x128xbf16>, vector<128x128xf32> -> vector<128x128xf32>
    %108 = vector.broadcast %101 : vector<1x128xf32> to vector<128x128xf32>
    %109 = arith.addf %107, %108 : vector<128x128xf32>
    %110 = arith.truncf %109 : vector<128x128xf32> to vector<128x128xbf16>
    %c128_87 = arith.constant 128 : index
    %c0_88 = arith.constant 0 : index
    %111 = vector.load %arg10[%c128_87, %c0_88] : memref<256x128xbf16, #tpu.memory_space<vmem>>, vector<128x128xbf16>
    tpu.vector_store %arg10[%c128_87, %c0_88], %110 {strides = array<i32>} : memref<256x128xbf16, #tpu.memory_space<vmem>>, vector<128x128xbf16>,
    return
  }
  func.func @transform_0(%arg0: i32) -> (i32, i32) {
    %c0_i32 = arith.constant 0 : i32
    %c0_i32_0 = arith.constant 0 : i32
    return %arg0, %c0_i32 : i32, i32
  }
  func.func @transform_1(%arg0: i32) -> (i32, i32) {
    %c0_i32 = arith.constant 0 : i32
    %c0_i32_0 = arith.constant 0 : i32
    %c0_i32_1 = arith.constant 0 : i32
    return %c0_i32, %c0_i32_0 : i32, i32
  }
  func.func @transform_2(%arg0: i32) -> (i32, i32) {
    %c0_i32 = arith.constant 0 : i32
    %c0_i32_0 = arith.constant 0 : i32
    %c0_i32_1 = arith.constant 0 : i32
    return %c0_i32, %c0_i32_0 : i32, i32
  }
  func.func @transform_3(%arg0: i32) -> (i32, i32, i32) {
    %c0_i32 = arith.constant 0 : i32
    %c0_i32_0 = arith.constant 0 : i32
    %c0_i32_1 = arith.constant 0 : i32
    %c0_i32_2 = arith.constant 0 : i32
    return %c0_i32, %c0_i32_0, %c0_i32_1 : i32, i32, i32
  }
  func.func @transform_4(%arg0: i32) -> (i32, i32) {
    %c0_i32 = arith.constant 0 : i32
    %c0_i32_0 = arith.constant 0 : i32
    %c0_i32_1 = arith.constant 0 : i32
    return %c0_i32, %c0_i32_0 : i32, i32
  }
  func.func @transform_5(%arg0: i32) -> (i32, i32, i32) {
    %c0_i32 = arith.constant 0 : i32
    %c0_i32_0 = arith.constant 0 : i32
    %c0_i32_1 = arith.constant 0 : i32
    %c0_i32_2 = arith.constant 0 : i32
    return %c0_i32, %c0_i32_0, %c0_i32_1 : i32, i32, i32
  }
  func.func @transform_6(%arg0: i32) -> (i32, i32) {
    %c0_i32 = arith.constant 0 : i32
    %c0_i32_0 = arith.constant 0 : i32
    %c0_i32_1 = arith.constant 0 : i32
    return %c0_i32, %c0_i32_0 : i32, i32
  }
  func.func @transform_7(%arg0: i32) -> (i32, i32) {
    %c0_i32 = arith.constant 0 : i32
    %c0_i32_0 = arith.constant 0 : i32
    %c0_i32_1 = arith.constant 0 : i32
    return %c0_i32, %c0_i32_0 : i32, i32
  }
  func.func @transform_8(%arg0: i32) -> (i32, i32) {
    %c0_i32 = arith.constant 0 : i32
    %c0_i32_0 = arith.constant 0 : i32
    %c0_i32_1 = arith.constant 0 : i32
    return %c0_i32, %c0_i32_0 : i32, i32
  }
  func.func @transform_9(%arg0: i32) -> (i32, i32) {
    %c0_i32 = arith.constant 0 : i32
    %c0_i32_0 = arith.constant 0 : i32
    return %arg0, %c0_i32 : i32, i32
  }
}

</mosaic_0001>

<llo_original>
// kernel: tpu_custom_call.1
$region0: #{tpu_custom_call.1}
  #allocation0 [shape = 'u32[]', space=smem, size = 0x4, offset = 0x4, fixed_abs, tag = 'smem constant byte address 0x4 - core index']
  #allocation1 [shape = 'u32[144,128]{1,0:T(1,128)}', space=vmem, size = 0x12000, scoped, tag = 'internal scratch']
  #allocation2 [shape = 'bf16[96,128]{1,0:T(8,128)(2,1)}', space=vmem, size = 0x6000, scoped, tag = 'scratch operand']
  #allocation3 [shape = 'bf16[160,128]{1,0:T(8,128)(2,1)}', space=vmem, size = 0xa000, scoped, tag = 'scratch operand']
  %s0 = inlined_call_operand.hbm [shape: f32[16,64], index: 0, kind: input, shape index: {}]
  %s1 = inlined_call_operand.hbm [shape: bf16[64,512], index: 1, kind: input, shape index: {}]
  %s2 = inlined_call_operand.hbm [shape: f32[1,512], index: 2, kind: input, shape index: {}]
  %s3 = inlined_call_operand.hbm [shape: bf16[4,128,128], index: 3, kind: input, shape index: {}]
  %s4 = inlined_call_operand.vmem [shape: f32[1,128], index: 4, kind: input, shape index: {}]
  %s5 = inlined_call_operand.hbm [shape: bf16[4,128,128], index: 5, kind: input, shape index: {}]
  %s6 = inlined_call_operand.vmem [shape: f32[1,128], index: 6, kind: input, shape index: {}]
  %s7 = inlined_call_operand.hbm [shape: bf16[128,128], index: 7, kind: input, shape index: {}]
  %s8 = inlined_call_operand.vmem [shape: f32[1,128], index: 8, kind: input, shape index: {}]
  %s9 = inlined_call_operand.hbm [shape: bf16[256,128], index: 9, kind: output, shape index: {}]
  %s10 = sld [smem:[#allocation0]]
  $region70: #{tpu_custom_call.1} parent=0
    _
  %s12 = ssub.s32 1, %s10
  %s13 = scalar_select 0, %s12, %s10
  $region1: #{tpu_custom_call.1} parent=0
    #allocation4 [shape = 'u8[8192]{0}', space=vmem, size = 0x2000, scoped, tag = 'input window, operand 0, single buffered']
    #allocation5 [shape = 's32[1]{0}', space=sflag, size = 0x4, scoped, tag = 'scoped memory for tpu_custom_call.1']
    #allocation6 [shape = 's32[1]{0}', space=sflag, size = 0x4, scoped, tag = 'scoped memory for tpu_custom_call.1']
    #allocation7 [shape = 'u8[65536]{0}', space=vmem, size = 0x10000, scoped, tag = 'input window, operand 1, single buffered']
    #allocation8 [shape = 's32[1]{0}', space=sflag, size = 0x4, scoped, tag = 'scoped memory for tpu_custom_call.1']
    #allocation9 [shape = 'u8[2048]{0}', space=vmem, size = 0x800, scoped, tag = 'input window, operand 2, single buffered']
    #allocation10 [shape = 'u8[131072]{0}', space=vmem, size = 0x20000, scoped, tag = 'input window, operand 3, single buffered']
    #allocation11 [shape = 's32[1]{0}', space=sflag, size = 0x4, scoped, tag = 'scoped memory for tpu_custom_call.1']
    #allocation12 [shape = 'u8[131072]{0}', space=vmem, size = 0x20000, scoped, tag = 'input window, operand 5, single buffered']
    #allocation13 [shape = 'u8[32768]{0}', space=vmem, size = 0x8000, scoped, tag = 'input window, operand 7, single buffered']
    #allocation14 [shape = 's32[1]{0}', space=sflag, size = 0x4, scoped, tag = 'scoped memory for tpu_custom_call.1']
    #allocation15 [shape = 'u8[65536]{0}', space=vmem, size = 0x10000, scoped, tag = 'output window, operand 0, single buffered']
    %14 = vsyncpa [#allocation5], 0
    %15 = vsyncpa [#allocation8], 0
    %16 = vsyncpa [#allocation11], 0
    %17 = vsyncpa [#allocation14], 0
    %18 = vsyncpa [#allocation6], 0
    // Predicated region
    $region2: #{tpu_custom_call.1} parent=1 // pred_check
      _
    $region3: #{tpu_custom_call.1} parent=1 // pred_check_branch
      %20 = sbr.rel (0) target = $region5
    $region4: #{tpu_custom_call.1} parent=1 // pred_region
      %s22 = ssub.s32 256, 256
      %23 = vsyncadd [#allocation5], %s22
      %s24 = sshll.u32 [#allocation4], 4
      %s25 = int_to_ptr.vmem [resolvable:$true] %s24
      %30 = dma.hbm_to_vmem [thread:$0]  %s0, 256, %s25, [#allocation5], 128, 128, 8
    $region5: #{tpu_custom_call.1} parent=1 // pred_fallthru
      _
    // Predicated region
    $region6: #{tpu_custom_call.1} parent=1 // pred_check
      _
    $region7: #{tpu_custom_call.1} parent=1 // pred_check_branch
      %32 = sbr.rel (0) target = $region9
    $region8: #{tpu_custom_call.1} parent=1 // pred_region
      %s34 = ssub.s32 2048, 2048
      %35 = vsyncadd [#allocation8], %s34
      %s36 = sshll.u32 [#allocation7], 4
      %s37 = int_to_ptr.vmem [resolvable:$true] %s36
      %42 = dma.hbm_to_vmem [thread:$0]  %s1, 2048, %s37, [#allocation8], 256, 256, 16
    $region9: #{tpu_custom_call.1} parent=1 // pred_fallthru
      _
    // Predicated region
    $region10: #{tpu_custom_call.1} parent=1 // pred_check
      _
    $region11: #{tpu_custom_call.1} parent=1 // pred_check_branch
      %44 = sbr.rel (0) target = $region13
    $region12: #{tpu_custom_call.1} parent=1 // pred_region
      %s46 = ssub.s32 64, 64
      %47 = vsyncadd [#allocation8], %s46
      %s49 = sshll.u32 [#allocation9], 4
      %s50 = int_to_ptr.vmem [resolvable:$true] %s49
      %52 = dma.hbm_to_vmem [thread:$0]  %s2, 64, %s50, [#allocation8]
    $region13: #{tpu_custom_call.1} parent=1 // pred_fallthru
      _
    // Predicated region
    $region14: #{tpu_custom_call.1} parent=1 // pred_check
      _
    $region15: #{tpu_custom_call.1} parent=1 // pred_check_branch
      %54 = sbr.rel (0) target = $region17
    $region16: #{tpu_custom_call.1} parent=1 // pred_region
      %s56 = ssub.s32 4096, 4096
      %57 = vsyncadd [#allocation11], %s56
      %s58 = sshll.u32 [#allocation10], 4
      %s59 = int_to_ptr.vmem [resolvable:$true] %s58
      %64 = dma.hbm_to_vmem [thread:$0]  %s3, 4096, %s59, [#allocation11], 64, 64, 4
    $region17: #{tpu_custom_call.1} parent=1 // pred_fallthru
      _
    // Predicated region
    $region18: #{tpu_custom_call.1} parent=1 // pred_check
      _
    $region19: #{tpu_custom_call.1} parent=1 // pred_check_branch
      %66 = sbr.rel (0) target = $region21
    $region20: #{tpu_custom_call.1} parent=1 // pred_region
      _
    $region21: #{tpu_custom_call.1} parent=1 // pred_fallthru
      _
    // Predicated region
    $region22: #{tpu_custom_call.1} parent=1 // pred_check
      _
    $region23: #{tpu_custom_call.1} parent=1 // pred_check_branch
      %68 = sbr.rel (0) target = $region25
    $region24: #{tpu_custom_call.1} parent=1 // pred_region
      %s70 = ssub.s32 4096, 4096
      %71 = vsyncadd [#allocation11], %s70
      %s72 = sshll.u32 [#allocation12], 4
      %s73 = int_to_ptr.vmem [resolvable:$true] %s72
      %78 = dma.hbm_to_vmem [thread:$0]  %s5, 4096, %s73, [#allocation11], 64, 64, 4
    $region25: #{tpu_custom_call.1} parent=1 // pred_fallthru
      _
    // Predicated region
    $region26: #{tpu_custom_call.1} parent=1 // pred_check
      _
    $region27: #{tpu_custom_call.1} parent=1 // pred_check_branch
      %80 = sbr.rel (0) target = $region29
    $region28: #{tpu_custom_call.1} parent=1 // pred_region
      _
    $region29: #{tpu_custom_call.1} parent=1 // pred_fallthru
      _
    // Predicated region
    $region30: #{tpu_custom_call.1} parent=1 // pred_check
      _
    $region31: #{tpu_custom_call.1} parent=1 // pred_check_branch
      %82 = sbr.rel (0) target = $region33
    $region32: #{tpu_custom_call.1} parent=1 // pred_region
      %s84 = ssub.s32 1024, 1024
      %85 = vsyncadd [#allocation14], %s84
      %s86 = sshll.u32 [#allocation13], 4
      %s87 = int_to_ptr.vmem [resolvable:$true] %s86
      %92 = dma.hbm_to_vmem [thread:$0]  %s7, 1024, %s87, [#allocation14], 64, 64, 4
    $region33: #{tpu_custom_call.1} parent=1 // pred_fallthru
      _
    // Predicated region
    $region34: #{tpu_custom_call.1} parent=1 // pred_check
      _
    $region35: #{tpu_custom_call.1} parent=1 // pred_check_branch
      %94 = sbr.rel (0) target = $region37
    $region36: #{tpu_custom_call.1} parent=1 // pred_region
      _
    $region37: #{tpu_custom_call.1} parent=1 // pred_fallthru
      _
    // Predicated region
    $region38: #{tpu_custom_call.1} parent=1 // pred_check
      _
    $region39: #{tpu_custom_call.1} parent=1 // pred_check_branch
      %96 = sbr.rel (0) target = $region41
    $region40: #{tpu_custom_call.1} parent=1 // pred_region
      %97 = dma.done [#allocation5], 256
    $region41: #{tpu_custom_call.1} parent=1 // pred_fallthru
      _
    // Predicated region
    $region42: #{tpu_custom_call.1} parent=1 // pred_check
      _
    $region43: #{tpu_custom_call.1} parent=1 // pred_check_branch
      %99 = sbr.rel (0) target = $region45
    $region44: #{tpu_custom_call.1} parent=1 // pred_region
      %100 = dma.done [#allocation8], 2048
    $region45: #{tpu_custom_call.1} parent=1 // pred_fallthru
      _
    // Predicated region
    $region46: #{tpu_custom_call.1} parent=1 // pred_check
      _
    $region47: #{tpu_custom_call.1} parent=1 // pred_check_branch
      %102 = sbr.rel (0) target = $region49
    $region48: #{tpu_custom_call.1} parent=1 // pred_region
      %103 = dma.done [#allocation8], 64
    $region49: #{tpu_custom_call.1} parent=1 // pred_fallthru
      _
    // Predicated region
    $region50: #{tpu_custom_call.1} parent=1 // pred_check
      _
    $region51: #{tpu_custom_call.1} parent=1 // pred_check_branch
      %105 = sbr.rel (0) target = $region53
    $region52: #{tpu_custom_call.1} parent=1 // pred_region
      %106 = dma.done [#allocation11], 4096
    $region53: #{tpu_custom_call.1} parent=1 // pred_fallthru
      _
    // Predicated region
    $region54: #{tpu_custom_call.1} parent=1 // pred_check
      _
    $region55: #{tpu_custom_call.1} parent=1 // pred_check_branch
      %108 = sbr.rel (0) target = $region57
    $region56: #{tpu_custom_call.1} parent=1 // pred_region
      %109 = dma.done [#allocation11], 4096
    $region57: #{tpu_custom_call.1} parent=1 // pred_fallthru
      _
    // Predicated region
    $region58: #{tpu_custom_call.1} parent=1 // pred_check
      _
    $region59: #{tpu_custom_call.1} parent=1 // pred_check_branch
      %111 = sbr.rel (0) target = $region61
    $region60: #{tpu_custom_call.1} parent=1 // pred_region
      %112 = dma.done [#allocation14], 1024
    $region61: #{tpu_custom_call.1} parent=1 // pred_fallthru
      _
    %114 = vst [vmem:[#allocation2] sm:$0xf] 0
    %115 = vst [vmem:[#allocation2 + $0x4] sm:$0xf] 0
    %116 = vst [vmem:[#allocation2 + $0x28] sm:$0xf] 0
    %117 = vst [vmem:[#allocation2 + $0x2c] sm:$0xf] 0
    %118 = vst [vmem:[#allocation3] sm:$0xf] 0
    %119 = vst [vmem:[#allocation3 + $0x4] sm:$0xf] 0
    %120 = vst [vmem:[#allocation3 + $0x48] sm:$0xf] 0
    %121 = vst [vmem:[#allocation3 + $0x4c] sm:$0xf] 0
    %v122 = vld [vmem:[#allocation4] sm:$0xff]
    %v123 = vld [vmem:[#allocation4 + $0x8] sm:$0xff]
    %v124 = vpack.c.bf16 %v123, %v122
    %v125 = vld [vmem:[#allocation7] sm:$0xff]
    %v126 = vld [vmem:[#allocation7 + $0x8] sm:$0xff]
    %v127 = vld [vmem:[#allocation7 + $0x10] sm:$0xff]
    %v128 = vld [vmem:[#allocation7 + $0x18] sm:$0xff]
    %v129 = vld [vmem:[#allocation7 + $0x20] sm:$0xff]
    %v130 = vld [vmem:[#allocation7 + $0x28] sm:$0xff]
    %v131 = vld [vmem:[#allocation7 + $0x30] sm:$0xff]
    %v132 = vld [vmem:[#allocation7 + $0x38] sm:$0xff]
    %v133 = vld [vmem:[#allocation7 + $0x40] sm:$0xff]
    %v134 = vld [vmem:[#allocation7 + $0x48] sm:$0xff]
    %v135 = vld [vmem:[#allocation7 + $0x50] sm:$0xff]
    %v136 = vld [vmem:[#allocation7 + $0x58] sm:$0xff]
    %v137 = vld [vmem:[#allocation7 + $0x60] sm:$0xff]
    %v138 = vld [vmem:[#allocation7 + $0x68] sm:$0xff]
    %v139 = vld [vmem:[#allocation7 + $0x70] sm:$0xff]
    %v140 = vld [vmem:[#allocation7 + $0x78] sm:$0xff]
    %v141 = vld [vmem:[#allocation9] sm:$0xf]
    %v143 = vlaneseq
    %v144 = vshrl.u32 %v143, 7
    %v145 = vsub.s32 0, %v144
    %v146 = vrot.slane %v141, %v145
    %v147 = vlaneseq
    %v148 = vshrl.u32 %v147, 7
    %v149 = vsub.s32 1, %v148
    %v150 = vrot.slane %v141, %v149
    %v151 = vlaneseq
    %v152 = vshrl.u32 %v151, 7
    %v153 = vsub.s32 2, %v152
    %v154 = vrot.slane %v141, %v153
    %v155 = vlaneseq
    %v156 = vshrl.u32 %v155, 7
    %v157 = vsub.s32 3, %v156
    %v158 = vrot.slane %v141, %v157
    %v179 = vunpack.c.l.b16 %v125
    %v180 = vunpack.c.h.b16 %v125
    %v181 = vunpack.c.l.b16 %v126
    %v182 = vunpack.c.h.b16 %v126
    %v183 = vunpack.c.l.b16 %v127
    %v184 = vunpack.c.h.b16 %v127
    %v185 = vunpack.c.l.b16 %v128
    %v186 = vunpack.c.h.b16 %v128
    %v187 = vunpack.c.l.b16 %v129
    %v188 = vunpack.c.h.b16 %v129
    %v189 = vunpack.c.l.b16 %v130
    %v190 = vunpack.c.h.b16 %v130
    %v191 = vunpack.c.l.b16 %v131
    %v192 = vunpack.c.h.b16 %v131
    %v193 = vunpack.c.l.b16 %v132
    %v194 = vunpack.c.h.b16 %v132
    %v195 = vunpack.c.l.b16 %v133
    %v196 = vunpack.c.h.b16 %v133
    %v197 = vunpack.c.l.b16 %v134
    %v198 = vunpack.c.h.b16 %v134
    %v199 = vunpack.c.l.b16 %v135
    %v200 = vunpack.c.h.b16 %v135
    %v201 = vunpack.c.l.b16 %v136
    %v202 = vunpack.c.h.b16 %v136
    %v203 = vunpack.c.l.b16 %v137
    %v204 = vunpack.c.h.b16 %v137
    %v205 = vunpack.c.l.b16 %v138
    %v206 = vunpack.c.h.b16 %v138
    %v207 = vunpack.c.l.b16 %v139
    %v208 = vunpack.c.h.b16 %v139
    %v209 = vunpack.c.l.b16 %v140
    %v210 = vunpack.c.h.b16 %v140
    %v211 = vpack.c.b16 %v183, %v179
    %v212 = vpack.c.b16 %v184, %v180
    %v213 = vpack.c.b16 %v185, %v181
    %v214 = vpack.c.b16 %v186, %v182
    %v215 = vpack.c.b16 %v191, %v187
    %v216 = vpack.c.b16 %v192, %v188
    %v217 = vpack.c.b16 %v193, %v189
    %v218 = vpack.c.b16 %v194, %v190
    %v219 = vpack.c.b16 %v199, %v195
    %v220 = vpack.c.b16 %v200, %v196
    %v221 = vpack.c.b16 %v201, %v197
    %v222 = vpack.c.b16 %v202, %v198
    %v223 = vpack.c.b16 %v207, %v203
    %v224 = vpack.c.b16 %v208, %v204
    %v225 = vpack.c.b16 %v209, %v205
    %v226 = vpack.c.b16 %v210, %v206
    %vm243 = vcmask 523264
    %v245 = vsel %vm243, %v124, 0
    %247 = vmatprep.subr.bf16.mxu0 0
    %248 = vmatpush1.bf16.msra.mxu0 0
    %249 = vmatprep.subr.bf16.mxu0 0
    %250 = vmatpush1.bf16.msra.mxu0 0
    %251 = vmatprep.subr.bf16.mxu0 0
    %252 = vmatpush1.bf16.msra.mxu0 0
    %253 = vmatprep.subr.bf16.mxu0 0
    %254 = vmatpush1.bf16.msra.mxu0 0
    %255 = vmatprep.subr.bf16.mxu0 %v224
    %256 = vmatpush1.bf16.msra.mxu0 %v223
    %257 = vmatprep.subr.bf16.mxu0 %v220
    %258 = vmatpush1.bf16.msra.mxu0 %v219
    %259 = vmatprep.subr.bf16.mxu0 %v216
    %260 = vmatpush1.bf16.msra.mxu0 %v215
    %261 = vmatprep.subr.bf16.mxu0 %v212
    %262 = vmatpush1.bf16.msra.mxu0 %v211
    %263 = vmatprep.subr.bf16.mxu0 0
    %264 = vmatpush2.bf16.msra.mxu0 0
    %265 = vmatprep.subr.bf16.mxu0 0
    %266 = vmatpush2.bf16.msra.mxu0 0
    %267 = vmatprep.subr.bf16.mxu0 0
    %268 = vmatpush2.bf16.msra.mxu0 0
    %269 = vmatprep.subr.bf16.mxu0 0
    %270 = vmatpush2.bf16.msra.mxu0 0
    %271 = vmatprep.subr.bf16.mxu0 0
    %272 = vmatpush2.bf16.msra.mxu0 0
    %273 = vmatprep.subr.bf16.mxu0 0
    %274 = vmatpush2.bf16.msra.mxu0 0
    %275 = vmatprep.subr.bf16.mxu0 0
    %276 = vmatpush2.bf16.msra.mxu0 0
    %277 = vmatprep.subr.bf16.mxu0 0
    %278 = vmatpush2.bf16.msra.mxu0 0
    %279 = vmatprep.mubr.bf16.mxu0 0
    %280 = vmatmul.mubr.bf16.gmra.mxu0 %v245
    %v281 = vpop.f32.mrf.mxu0
    %v282 = vadd.f32 %v146, %v281
    %v283 = vpop.f32.mrf.mxu0
    %v284 = vadd.f32 %v150, %v283
    %v285 = vpop.f32.mrf.mxu0
    %v286 = vadd.f32 %v146, %v285
    %v287 = vpop.f32.mrf.mxu0
    %v288 = vadd.f32 %v150, %v287
    %289 = vdwg.mxu0
    %290 = vmatprep.subr.bf16.mxu0 0
    %291 = vmatpush1.bf16.msra.mxu0 0
    %292 = vmatprep.subr.bf16.mxu0 0
    %293 = vmatpush1.bf16.msra.mxu0 0
    %294 = vmatprep.subr.bf16.mxu0 0
    %295 = vmatpush1.bf16.msra.mxu0 0
    %296 = vmatprep.subr.bf16.mxu0 0
    %297 = vmatpush1.bf16.msra.mxu0 0
    %298 = vmatprep.subr.bf16.mxu0 %v226
    %299 = vmatpush1.bf16.msra.mxu0 %v225
    %300 = vmatprep.subr.bf16.mxu0 %v222
    %301 = vmatpush1.bf16.msra.mxu0 %v221
    %302 = vmatprep.subr.bf16.mxu0 %v218
    %303 = vmatpush1.bf16.msra.mxu0 %v217
    %304 = vmatprep.subr.bf16.mxu0 %v214
    %305 = vmatpush1.bf16.msra.mxu0 %v213
    %306 = vmatprep.subr.bf16.mxu0 0
    %307 = vmatpush2.bf16.msra.mxu0 0
    %308 = vmatprep.subr.bf16.mxu0 0
    %309 = vmatpush2.bf16.msra.mxu0 0
    %310 = vmatprep.subr.bf16.mxu0 0
    %311 = vmatpush2.bf16.msra.mxu0 0
    %312 = vmatprep.subr.bf16.mxu0 0
    %313 = vmatpush2.bf16.msra.mxu0 0
    %314 = vmatprep.subr.bf16.mxu0 0
    %315 = vmatpush2.bf16.msra.mxu0 0
    %316 = vmatprep.subr.bf16.mxu0 0
    %317 = vmatpush2.bf16.msra.mxu0 0
    %318 = vmatprep.subr.bf16.mxu0 0
    %319 = vmatpush2.bf16.msra.mxu0 0
    %320 = vmatprep.subr.bf16.mxu0 0
    %321 = vmatpush2.bf16.msra.mxu0 0
    %322 = vmatprep.mubr.bf16.mxu0 0
    %323 = vmatmul.mubr.bf16.gmra.mxu0 %v245
    %v324 = vpop.f32.mrf.mxu0
    %v325 = vadd.f32 %v154, %v324
    %v326 = vpop.f32.mrf.mxu0
    %v327 = vadd.f32 %v158, %v326
    %v328 = vpop.f32.mrf.mxu0
    %v329 = vadd.f32 %v154, %v328
    %v330 = vpop.f32.mrf.mxu0
    %v331 = vadd.f32 %v158, %v330
    %332 = vdwg.mxu0
    %v333 = vmul.f32 %v282, 0.2
    %v334 = vmul.f32 %v284, 0.2
    %v335 = vmul.f32 %v325, 0.2
    %v336 = vmul.f32 %v327, 0.2
    %v337 = vmul.f32 %v286, 0.2
    %v338 = vmul.f32 %v288, 0.2
    %v339 = vmul.f32 %v329, 0.2
    %v340 = vmul.f32 %v331, 0.2
    %v341 = vmax.f32 %v282, %v333
    %v342 = vmax.f32 %v284, %v334
    %v343 = vmax.f32 %v325, %v335
    %v344 = vmax.f32 %v327, %v336
    %v345 = vmax.f32 %v286, %v337
    %v346 = vmax.f32 %v288, %v338
    %v347 = vmax.f32 %v329, %v339
    %v348 = vmax.f32 %v331, %v340
    %v349 = vpack.c.bf16 %v345, %v341
    %v350 = vpack.c.bf16 %v346, %v342
    %v351 = vpack.c.bf16 %v347, %v343
    %v352 = vpack.c.bf16 %v348, %v344
    %v354 = vunpack.c.l.b16 %v349
    %v355 = vunpack.c.h.b16 %v349
    %v356 = vpack.c.b16 %v354, %v354
    %v357 = vpack.c.b16 %v355, %v355
    %360 = vst [vmem:[#allocation2 + $0x8] sm:$0xf] %v356
    %361 = vst [vmem:[#allocation2 + $0xc] sm:$0xf] %v357
    %v363 = vunpack.c.l.b16 %v350
    %v364 = vunpack.c.h.b16 %v350
    %v365 = vpack.c.b16 %v363, %v363
    %v366 = vpack.c.b16 %v364, %v364
    %369 = vst [vmem:[#allocation2 + $0x10] sm:$0xf] %v365
    %370 = vst [vmem:[#allocation2 + $0x14] sm:$0xf] %v366
    %v372 = vunpack.c.l.b16 %v351
    %v373 = vunpack.c.h.b16 %v351
    %v374 = vpack.c.b16 %v372, %v372
    %v375 = vpack.c.b16 %v373, %v373
    %378 = vst [vmem:[#allocation2 + $0x18] sm:$0xf] %v374
    %379 = vst [vmem:[#allocation2 + $0x1c] sm:$0xf] %v375
    %v381 = vunpack.c.l.b16 %v352
    %v382 = vunpack.c.h.b16 %v352
    %v383 = vpack.c.b16 %v381, %v381
    %v384 = vpack.c.b16 %v382, %v382
    %387 = vst [vmem:[#allocation2 + $0x20] sm:$0xf] %v383
    %388 = vst [vmem:[#allocation2 + $0x24] sm:$0xf] %v384
    %v389 = vld [vmem:[#allocation2] sm:$0xf]
    %v390 = vld [vmem:[#allocation2 + $0x4] sm:$0xf]
    %v391 = vld [vmem:[#allocation2 + $0x8] sm:$0xf]
    %v392 = vld [vmem:[#allocation2 + $0xc] sm:$0xf]
    %v393 = vld [vmem:[#allocation2 + $0x10] sm:$0xf]
    %v394 = vld [vmem:[#allocation2 + $0x14] sm:$0xf]
    %v395 = vld [vmem:[#allocation2 + $0x18] sm:$0xf]
    %v396 = vld [vmem:[#allocation2 + $0x1c] sm:$0xf]
    %v397 = vld [vmem:[#allocation2 + $0x20] sm:$0xf]
    %v398 = vld [vmem:[#allocation2 + $0x24] sm:$0xf]
    %v399 = vld [vmem:[#allocation2 + $0x10] sm:$0xf]
    %v400 = vld [vmem:[#allocation2 + $0x14] sm:$0xf]
    %v401 = vld [vmem:[#allocation2 + $0x18] sm:$0xf]
    %v402 = vld [vmem:[#allocation2 + $0x1c] sm:$0xf]
    %v403 = vld [vmem:[#allocation2 + $0x20] sm:$0xf]
    %v404 = vld [vmem:[#allocation2 + $0x24] sm:$0xf]
    %v405 = vld [vmem:[#allocation2 + $0x28] sm:$0xf]
    %v406 = vld [vmem:[#allocation2 + $0x2c] sm:$0xf]
    %v407 = vld [vmem:[%s4] sm:$0x1]
    %v408 = vld [vmem:[#allocation10] sm:$0xf]
    %v409 = vld [vmem:[#allocation10 + $0x4] sm:$0xf]
    %v410 = vld [vmem:[#allocation10 + $0x8] sm:$0xf]
    %v411 = vld [vmem:[#allocation10 + $0xc] sm:$0xf]
    %v412 = vld [vmem:[#allocation10 + $0x10] sm:$0xf]
    %v413 = vld [vmem:[#allocation10 + $0x14] sm:$0xf]
    %v414 = vld [vmem:[#allocation10 + $0x18] sm:$0xf]
    %v415 = vld [vmem:[#allocation10 + $0x1c] sm:$0xf]
    %v416 = vld [vmem:[#allocation10 + $0x20] sm:$0xf]
    %v417 = vld [vmem:[#allocation10 + $0x24] sm:$0xf]
    %v418 = vld [vmem:[#allocation10 + $0x28] sm:$0xf]
    %v419 = vld [vmem:[#allocation10 + $0x2c] sm:$0xf]
    %v420 = vld [vmem:[#allocation10 + $0x30] sm:$0xf]
    %v421 = vld [vmem:[#allocation10 + $0x34] sm:$0xf]
    %v422 = vld [vmem:[#allocation10 + $0x38] sm:$0xf]
    %v423 = vld [vmem:[#allocation10 + $0x3c] sm:$0xf]
    %s424 = scalar_lea.vmem [#allocation10], 64
    %v425 = vld [vmem:[%s424] sm:$0xf]
    %v426 = vld [vmem:[%s424 + $0x4] sm:$0xf]
    %v427 = vld [vmem:[%s424 + $0x8] sm:$0xf]
    %v428 = vld [vmem:[%s424 + $0xc] sm:$0xf]
    %v429 = vld [vmem:[%s424 + $0x10] sm:$0xf]
    %v430 = vld [vmem:[%s424 + $0x14] sm:$0xf]
    %v431 = vld [vmem:[%s424 + $0x18] sm:$0xf]
    %v432 = vld [vmem:[%s424 + $0x1c] sm:$0xf]
    %v433 = vld [vmem:[%s424 + $0x20] sm:$0xf]
    %v434 = vld [vmem:[%s424 + $0x24] sm:$0xf]
    %v435 = vld [vmem:[%s424 + $0x28] sm:$0xf]
    %v436 = vld [vmem:[%s424 + $0x2c] sm:$0xf]
    %v437 = vld [vmem:[%s424 + $0x30] sm:$0xf]
    %v438 = vld [vmem:[%s424 + $0x34] sm:$0xf]
    %v439 = vld [vmem:[%s424 + $0x38] sm:$0xf]
    %v440 = vld [vmem:[%s424 + $0x3c] sm:$0xf]
    %v449 = vunpack.c.l.b16 %v391
    %v450 = vunpack.c.l.b16 %v392
    %v451 = vunpack.c.l.b16 %v393
    %v452 = vunpack.c.l.b16 %v394
    %v453 = vunpack.c.l.b16 %v395
    %v454 = vunpack.c.l.b16 %v396
    %v455 = vunpack.c.l.b16 %v397
    %v456 = vunpack.c.l.b16 %v398
    %v457 = vpack.c.b16 %v450, %v449
    %v458 = vpack.c.b16 %v452, %v451
    %v459 = vpack.c.b16 %v454, %v453
    %v460 = vpack.c.b16 %v456, %v455
    %v481 = vunpack.c.l.b16 %v425
    %v482 = vunpack.c.l.b16 %v426
    %v483 = vunpack.c.l.b16 %v427
    %v484 = vunpack.c.l.b16 %v428
    %v485 = vunpack.c.l.b16 %v429
    %v486 = vunpack.c.l.b16 %v430
    %v487 = vunpack.c.l.b16 %v431
    %v488 = vunpack.c.l.b16 %v432
    %v489 = vunpack.c.l.b16 %v433
    %v490 = vunpack.c.l.b16 %v434
    %v491 = vunpack.c.l.b16 %v435
    %v492 = vunpack.c.l.b16 %v436
    %v493 = vunpack.c.l.b16 %v437
    %v494 = vunpack.c.l.b16 %v438
    %v495 = vunpack.c.l.b16 %v439
    %v496 = vunpack.c.l.b16 %v440
    %v497 = vpack.c.b16 %v482, %v481
    %v498 = vpack.c.b16 %v484, %v483
    %v499 = vpack.c.b16 %v486, %v485
    %v500 = vpack.c.b16 %v488, %v487
    %v501 = vpack.c.b16 %v490, %v489
    %v502 = vpack.c.b16 %v492, %v491
    %v503 = vpack.c.b16 %v494, %v493
    %v504 = vpack.c.b16 %v496, %v495
    %513 = vmatprep.subr.bf16.mxu0 0
    %514 = vmatpush1.bf16.msra.mxu0 %v504
    %515 = vmatprep.subr.bf16.mxu0 0
    %516 = vmatpush1.bf16.msra.mxu0 %v503
    %517 = vmatprep.subr.bf16.mxu0 0
    %518 = vmatpush1.bf16.msra.mxu0 %v502
    %519 = vmatprep.subr.bf16.mxu0 0
    %520 = vmatpush1.bf16.msra.mxu0 %v501
    %521 = vmatprep.subr.bf16.mxu0 0
    %522 = vmatpush1.bf16.msra.mxu0 %v500
    %523 = vmatprep.subr.bf16.mxu0 0
    %524 = vmatpush1.bf16.msra.mxu0 %v499
    %525 = vmatprep.subr.bf16.mxu0 0
    %526 = vmatpush1.bf16.msra.mxu0 %v498
    %527 = vmatprep.subr.bf16.mxu0 0
    %528 = vmatpush1.bf16.msra.mxu0 %v497
    %529 = vmatprep.subr.bf16.mxu0 0
    %530 = vmatpush2.bf16.msra.mxu0 0
    %531 = vmatprep.subr.bf16.mxu0 0
    %532 = vmatpush2.bf16.msra.mxu0 0
    %533 = vmatprep.subr.bf16.mxu0 0
    %534 = vmatpush2.bf16.msra.mxu0 0
    %535 = vmatprep.subr.bf16.mxu0 0
    %536 = vmatpush2.bf16.msra.mxu0 0
    %537 = vmatprep.subr.bf16.mxu0 0
    %538 = vmatpush2.bf16.msra.mxu0 0
    %539 = vmatprep.subr.bf16.mxu0 0
    %540 = vmatpush2.bf16.msra.mxu0 0
    %541 = vmatprep.subr.bf16.mxu0 0
    %542 = vmatpush2.bf16.msra.mxu0 0
    %543 = vmatprep.subr.bf16.mxu0 0
    %544 = vmatpush2.bf16.msra.mxu0 0
    %545 = vmatprep.mubr.bf16.mxu0 0
    %546 = vmatmul.mubr.bf16.gmra.mxu0 %v457
    %v547 = vpop.f32.mrf.mxu0
    %v548 = vadd.f32 0.0, %v547
    %v549 = vpop.f32.mrf.mxu0
    %v550 = vpop.f32.mrf.mxu0
    %v551 = vadd.f32 0.0, %v550
    %v552 = vpop.f32.mrf.mxu0
    %553 = vmatprep.mubr.bf16.mxu0 0
    %554 = vmatmul.mubr.bf16.gmra.mxu0 %v458
    %v555 = vpop.f32.mrf.mxu0
    %v556 = vadd.f32 0.0, %v555
    %v557 = vpop.f32.mrf.mxu0
    %v558 = vpop.f32.mrf.mxu0
    %v559 = vadd.f32 0.0, %v558
    %v560 = vpop.f32.mrf.mxu0
    %561 = vmatprep.mubr.bf16.mxu0 0
    %562 = vmatmul.mubr.bf16.gmra.mxu0 %v459
    %v563 = vpop.f32.mrf.mxu0
    %v564 = vadd.f32 0.0, %v563
    %v565 = vpop.f32.mrf.mxu0
    %v566 = vpop.f32.mrf.mxu0
    %v567 = vadd.f32 0.0, %v566
    %v568 = vpop.f32.mrf.mxu0
    %569 = vmatprep.mubr.bf16.mxu0 0
    %570 = vmatmul.mubr.bf16.gmra.mxu0 %v460
    %v571 = vpop.f32.mrf.mxu0
    %v572 = vadd.f32 0.0, %v571
    %v573 = vpop.f32.mrf.mxu0
    %v574 = vpop.f32.mrf.mxu0
    %v575 = vadd.f32 0.0, %v574
    %v576 = vpop.f32.mrf.mxu0
    %577 = vdwg.mxu0
    %v580 = vunpack.c.l.b16 %v389
    %v581 = vunpack.c.l.b16 %v390
    %v582 = vpack.c.b16 %v581, %v580
    %v600 = vunpack.c.l.b16 %v408
    %v601 = vunpack.c.l.b16 %v409
    %v602 = vunpack.c.l.b16 %v410
    %v603 = vunpack.c.l.b16 %v411
    %v604 = vunpack.c.l.b16 %v412
    %v605 = vunpack.c.l.b16 %v413
    %v606 = vunpack.c.l.b16 %v414
    %v607 = vunpack.c.l.b16 %v415
    %v608 = vunpack.c.l.b16 %v416
    %v609 = vunpack.c.l.b16 %v417
    %v610 = vunpack.c.l.b16 %v418
    %v611 = vunpack.c.l.b16 %v419
    %v612 = vunpack.c.l.b16 %v420
    %v613 = vunpack.c.l.b16 %v421
    %v614 = vunpack.c.l.b16 %v422
    %v615 = vunpack.c.l.b16 %v423
    %v616 = vpack.c.b16 %v601, %v600
    %v617 = vpack.c.b16 %v603, %v602
    %v618 = vpack.c.b16 %v605, %v604
    %v619 = vpack.c.b16 %v607, %v606
    %v620 = vpack.c.b16 %v609, %v608
    %v621 = vpack.c.b16 %v611, %v610
    %v622 = vpack.c.b16 %v613, %v612
    %v623 = vpack.c.b16 %v615, %v614
    %632 = vmatprep.subr.bf16.mxu0 0
    %633 = vmatpush1.bf16.msra.mxu0 %v623
    %634 = vmatprep.subr.bf16.mxu0 0
    %635 = vmatpush1.bf16.msra.mxu0 %v622
    %636 = vmatprep.subr.bf16.mxu0 0
    %637 = vmatpush1.bf16.msra.mxu0 %v621
    %638 = vmatprep.subr.bf16.mxu0 0
    %639 = vmatpush1.bf16.msra.mxu0 %v620
    %640 = vmatprep.subr.bf16.mxu0 0
    %641 = vmatpush1.bf16.msra.mxu0 %v619
    %642 = vmatprep.subr.bf16.mxu0 0
    %643 = vmatpush1.bf16.msra.mxu0 %v618
    %644 = vmatprep.subr.bf16.mxu0 0
    %645 = vmatpush1.bf16.msra.mxu0 %v617
    %646 = vmatprep.subr.bf16.mxu0 0
    %647 = vmatpush1.bf16.msra.mxu0 %v616
    %648 = vmatprep.subr.bf16.mxu0 0
    %649 = vmatpush2.bf16.msra.mxu0 0
    %650 = vmatprep.subr.bf16.mxu0 0
    %651 = vmatpush2.bf16.msra.mxu0 0
    %652 = vmatprep.subr.bf16.mxu0 0
    %653 = vmatpush2.bf16.msra.mxu0 0
    %654 = vmatprep.subr.bf16.mxu0 0
    %655 = vmatpush2.bf16.msra.mxu0 0
    %656 = vmatprep.subr.bf16.mxu0 0
    %657 = vmatpush2.bf16.msra.mxu0 0
    %658 = vmatprep.subr.bf16.mxu0 0
    %659 = vmatpush2.bf16.msra.mxu0 0
    %660 = vmatprep.subr.bf16.mxu0 0
    %661 = vmatpush2.bf16.msra.mxu0 0
    %662 = vmatprep.subr.bf16.mxu0 0
    %663 = vmatpush2.bf16.msra.mxu0 0
    %664 = vmatprep.mubr.bf16.mxu0 0
    %665 = vmatmul.mubr.bf16.gmra.mxu0 %v582
    %v666 = vpop.f32.mrf.mxu0
    %v667 = vadd.f32 %v548, %v666
    %v668 = vpop.f32.mrf.mxu0
    %v669 = vpop.f32.mrf.mxu0
    %v670 = vadd.f32 %v551, %v669
    %v671 = vpop.f32.mrf.mxu0
    %672 = vmatprep.mubr.bf16.mxu0 0
    %673 = vmatmul.mubr.bf16.gmra.mxu0 %v457
    %v674 = vpop.f32.mrf.mxu0
    %v675 = vadd.f32 %v556, %v674
    %v676 = vpop.f32.mrf.mxu0
    %v677 = vpop.f32.mrf.mxu0
    %v678 = vadd.f32 %v559, %v677
    %v679 = vpop.f32.mrf.mxu0
    %680 = vmatprep.mubr.bf16.mxu0 0
    %681 = vmatmul.mubr.bf16.gmra.mxu0 %v458
    %v682 = vpop.f32.mrf.mxu0
    %v683 = vadd.f32 %v564, %v682
    %v684 = vpop.f32.mrf.mxu0
    %v685 = vpop.f32.mrf.mxu0
    %v686 = vadd.f32 %v567, %v685
    %v687 = vpop.f32.mrf.mxu0
    %688 = vmatprep.mubr.bf16.mxu0 0
    %689 = vmatmul.mubr.bf16.gmra.mxu0 %v459
    %v690 = vpop.f32.mrf.mxu0
    %v691 = vadd.f32 %v572, %v690
    %v692 = vpop.f32.mrf.mxu0
    %v693 = vpop.f32.mrf.mxu0
    %v694 = vadd.f32 %v575, %v693
    %v695 = vpop.f32.mrf.mxu0
    %696 = vdwg.mxu0
    %s697 = scalar_lea.vmem [#allocation10], 128
    %v698 = vld [vmem:[%s697] sm:$0xf]
    %v699 = vld [vmem:[%s697 + $0x4] sm:$0xf]
    %v700 = vld [vmem:[%s697 + $0x8] sm:$0xf]
    %v701 = vld [vmem:[%s697 + $0xc] sm:$0xf]
    %v702 = vld [vmem:[%s697 + $0x10] sm:$0xf]
    %v703 = vld [vmem:[%s697 + $0x14] sm:$0xf]
    %v704 = vld [vmem:[%s697 + $0x18] sm:$0xf]
    %v705 = vld [vmem:[%s697 + $0x1c] sm:$0xf]
    %v706 = vld [vmem:[%s697 + $0x20] sm:$0xf]
    %v707 = vld [vmem:[%s697 + $0x24] sm:$0xf]
    %v708 = vld [vmem:[%s697 + $0x28] sm:$0xf]
    %v709 = vld [vmem:[%s697 + $0x2c] sm:$0xf]
    %v710 = vld [vmem:[%s697 + $0x30] sm:$0xf]
    %v711 = vld [vmem:[%s697 + $0x34] sm:$0xf]
    %v712 = vld [vmem:[%s697 + $0x38] sm:$0xf]
    %v713 = vld [vmem:[%s697 + $0x3c] sm:$0xf]
    %s714 = scalar_lea.vmem [#allocation10], 192
    %v715 = vld [vmem:[%s714] sm:$0xf]
    %v716 = vld [vmem:[%s714 + $0x4] sm:$0xf]
    %v717 = vld [vmem:[%s714 + $0x8] sm:$0xf]
    %v718 = vld [vmem:[%s714 + $0xc] sm:$0xf]
    %v719 = vld [vmem:[%s714 + $0x10] sm:$0xf]
    %v720 = vld [vmem:[%s714 + $0x14] sm:$0xf]
    %v721 = vld [vmem:[%s714 + $0x18] sm:$0xf]
    %v722 = vld [vmem:[%s714 + $0x1c] sm:$0xf]
    %v723 = vld [vmem:[%s714 + $0x20] sm:$0xf]
    %v724 = vld [vmem:[%s714 + $0x24] sm:$0xf]
    %v725 = vld [vmem:[%s714 + $0x28] sm:$0xf]
    %v726 = vld [vmem:[%s714 + $0x2c] sm:$0xf]
    %v727 = vld [vmem:[%s714 + $0x30] sm:$0xf]
    %v728 = vld [vmem:[%s714 + $0x34] sm:$0xf]
    %v729 = vld [vmem:[%s714 + $0x38] sm:$0xf]
    %v730 = vld [vmem:[%s714 + $0x3c] sm:$0xf]
    %v739 = vunpack.c.l.b16 %v399
    %v740 = vunpack.c.l.b16 %v400
    %v741 = vunpack.c.l.b16 %v401
    %v742 = vunpack.c.l.b16 %v402
    %v743 = vunpack.c.l.b16 %v403
    %v744 = vunpack.c.l.b16 %v404
    %v745 = vunpack.c.l.b16 %v405
    %v746 = vunpack.c.l.b16 %v406
    %v747 = vpack.c.b16 %v740, %v739
    %v748 = vpack.c.b16 %v742, %v741
    %v749 = vpack.c.b16 %v744, %v743
    %v750 = vpack.c.b16 %v746, %v745
    %v771 = vunpack.c.l.b16 %v715
    %v772 = vunpack.c.l.b16 %v716
    %v773 = vunpack.c.l.b16 %v717
    %v774 = vunpack.c.l.b16 %v718
    %v775 = vunpack.c.l.b16 %v719
    %v776 = vunpack.c.l.b16 %v720
    %v777 = vunpack.c.l.b16 %v721
    %v778 = vunpack.c.l.b16 %v722
    %v779 = vunpack.c.l.b16 %v723
    %v780 = vunpack.c.l.b16 %v724
    %v781 = vunpack.c.l.b16 %v725
    %v782 = vunpack.c.l.b16 %v726
    %v783 = vunpack.c.l.b16 %v727
    %v784 = vunpack.c.l.b16 %v728
    %v785 = vunpack.c.l.b16 %v729
    %v786 = vunpack.c.l.b16 %v730
    %v787 = vpack.c.b16 %v772, %v771
    %v788 = vpack.c.b16 %v774, %v773
    %v789 = vpack.c.b16 %v776, %v775
    %v790 = vpack.c.b16 %v778, %v777
    %v791 = vpack.c.b16 %v780, %v779
    %v792 = vpack.c.b16 %v782, %v781
    %v793 = vpack.c.b16 %v784, %v783
    %v794 = vpack.c.b16 %v786, %v785
    %803 = vmatprep.subr.bf16.mxu0 0
    %804 = vmatpush1.bf16.msra.mxu0 %v794
    %805 = vmatprep.subr.bf16.mxu0 0
    %806 = vmatpush1.bf16.msra.mxu0 %v793
    %807 = vmatprep.subr.bf16.mxu0 0
    %808 = vmatpush1.bf16.msra.mxu0 %v792
    %809 = vmatprep.subr.bf16.mxu0 0
    %810 = vmatpush1.bf16.msra.mxu0 %v791
    %811 = vmatprep.subr.bf16.mxu0 0
    %812 = vmatpush1.bf16.msra.mxu0 %v790
    %813 = vmatprep.subr.bf16.mxu0 0
    %814 = vmatpush1.bf16.msra.mxu0 %v789
    %815 = vmatprep.subr.bf16.mxu0 0
    %816 = vmatpush1.bf16.msra.mxu0 %v788
    %817 = vmatprep.subr.bf16.mxu0 0
    %818 = vmatpush1.bf16.msra.mxu0 %v787
    %819 = vmatprep.subr.bf16.mxu0 0
    %820 = vmatpush2.bf16.msra.mxu0 0
    %821 = vmatprep.subr.bf16.mxu0 0
    %822 = vmatpush2.bf16.msra.mxu0 0
    %823 = vmatprep.subr.bf16.mxu0 0
    %824 = vmatpush2.bf16.msra.mxu0 0
    %825 = vmatprep.subr.bf16.mxu0 0
    %826 = vmatpush2.bf16.msra.mxu0 0
    %827 = vmatprep.subr.bf16.mxu0 0
    %828 = vmatpush2.bf16.msra.mxu0 0
    %829 = vmatprep.subr.bf16.mxu0 0
    %830 = vmatpush2.bf16.msra.mxu0 0
    %831 = vmatprep.subr.bf16.mxu0 0
    %832 = vmatpush2.bf16.msra.mxu0 0
    %833 = vmatprep.subr.bf16.mxu0 0
    %834 = vmatpush2.bf16.msra.mxu0 0
    %835 = vmatprep.mubr.bf16.mxu0 0
    %836 = vmatmul.mubr.bf16.gmra.mxu0 %v747
    %v837 = vpop.f32.mrf.mxu0
    %v838 = vadd.f32 0.0, %v837
    %v839 = vpop.f32.mrf.mxu0
    %v840 = vpop.f32.mrf.mxu0
    %v841 = vadd.f32 0.0, %v840
    %v842 = vpop.f32.mrf.mxu0
    %843 = vmatprep.mubr.bf16.mxu0 0
    %844 = vmatmul.mubr.bf16.gmra.mxu0 %v748
    %v845 = vpop.f32.mrf.mxu0
    %v846 = vadd.f32 0.0, %v845
    %v847 = vpop.f32.mrf.mxu0
    %v848 = vpop.f32.mrf.mxu0
    %v849 = vadd.f32 0.0, %v848
    %v850 = vpop.f32.mrf.mxu0
    %851 = vmatprep.mubr.bf16.mxu0 0
    %852 = vmatmul.mubr.bf16.gmra.mxu0 %v749
    %v853 = vpop.f32.mrf.mxu0
    %v854 = vadd.f32 0.0, %v853
    %v855 = vpop.f32.mrf.mxu0
    %v856 = vpop.f32.mrf.mxu0
    %v857 = vadd.f32 0.0, %v856
    %v858 = vpop.f32.mrf.mxu0
    %859 = vmatprep.mubr.bf16.mxu0 0
    %860 = vmatmul.mubr.bf16.gmra.mxu0 %v750
    %v861 = vpop.f32.mrf.mxu0
    %v862 = vadd.f32 0.0, %v861
    %v863 = vpop.f32.mrf.mxu0
    %v864 = vpop.f32.mrf.mxu0
    %v865 = vadd.f32 0.0, %v864
    %v866 = vpop.f32.mrf.mxu0
    %867 = vdwg.mxu0
    %v884 = vunpack.c.l.b16 %v698
    %v885 = vunpack.c.l.b16 %v699
    %v886 = vunpack.c.l.b16 %v700
    %v887 = vunpack.c.l.b16 %v701
    %v888 = vunpack.c.l.b16 %v702
    %v889 = vunpack.c.l.b16 %v703
    %v890 = vunpack.c.l.b16 %v704
    %v891 = vunpack.c.l.b16 %v705
    %v892 = vunpack.c.l.b16 %v706
    %v893 = vunpack.c.l.b16 %v707
    %v894 = vunpack.c.l.b16 %v708
    %v895 = vunpack.c.l.b16 %v709
    %v896 = vunpack.c.l.b16 %v710
    %v897 = vunpack.c.l.b16 %v711
    %v898 = vunpack.c.l.b16 %v712
    %v899 = vunpack.c.l.b16 %v713
    %v900 = vpack.c.b16 %v885, %v884
    %v901 = vpack.c.b16 %v887, %v886
    %v902 = vpack.c.b16 %v889, %v888
    %v903 = vpack.c.b16 %v891, %v890
    %v904 = vpack.c.b16 %v893, %v892
    %v905 = vpack.c.b16 %v895, %v894
    %v906 = vpack.c.b16 %v897, %v896
    %v907 = vpack.c.b16 %v899, %v898
    %916 = vmatprep.subr.bf16.mxu0 0
    %917 = vmatpush1.bf16.msra.mxu0 %v907
    %918 = vmatprep.subr.bf16.mxu0 0
    %919 = vmatpush1.bf16.msra.mxu0 %v906
    %920 = vmatprep.subr.bf16.mxu0 0
    %921 = vmatpush1.bf16.msra.mxu0 %v905
    %922 = vmatprep.subr.bf16.mxu0 0
    %923 = vmatpush1.bf16.msra.mxu0 %v904
    %924 = vmatprep.subr.bf16.mxu0 0
    %925 = vmatpush1.bf16.msra.mxu0 %v903
    %926 = vmatprep.subr.bf16.mxu0 0
    %927 = vmatpush1.bf16.msra.mxu0 %v902
    %928 = vmatprep.subr.bf16.mxu0 0
    %929 = vmatpush1.bf16.msra.mxu0 %v901
    %930 = vmatprep.subr.bf16.mxu0 0
    %931 = vmatpush1.bf16.msra.mxu0 %v900
    %932 = vmatprep.subr.bf16.mxu0 0
    %933 = vmatpush2.bf16.msra.mxu0 0
    %934 = vmatprep.subr.bf16.mxu0 0
    %935 = vmatpush2.bf16.msra.mxu0 0
    %936 = vmatprep.subr.bf16.mxu0 0
    %937 = vmatpush2.bf16.msra.mxu0 0
    %938 = vmatprep.subr.bf16.mxu0 0
    %939 = vmatpush2.bf16.msra.mxu0 0
    %940 = vmatprep.subr.bf16.mxu0 0
    %941 = vmatpush2.bf16.msra.mxu0 0
    %942 = vmatprep.subr.bf16.mxu0 0
    %943 = vmatpush2.bf16.msra.mxu0 0
    %944 = vmatprep.subr.bf16.mxu0 0
    %945 = vmatpush2.bf16.msra.mxu0 0
    %946 = vmatprep.subr.bf16.mxu0 0
    %947 = vmatpush2.bf16.msra.mxu0 0
    %948 = vmatprep.mubr.bf16.mxu0 0
    %949 = vmatmul.mubr.bf16.gmra.mxu0 %v457
    %v950 = vpop.f32.mrf.mxu0
    %v951 = vadd.f32 %v838, %v950
    %v952 = vpop.f32.mrf.mxu0
    %v953 = vpop.f32.mrf.mxu0
    %v954 = vadd.f32 %v841, %v953
    %v955 = vpop.f32.mrf.mxu0
    %956 = vmatprep.mubr.bf16.mxu0 0
    %957 = vmatmul.mubr.bf16.gmra.mxu0 %v458
    %v958 = vpop.f32.mrf.mxu0
    %v959 = vadd.f32 %v846, %v958
    %v960 = vpop.f32.mrf.mxu0
    %v961 = vpop.f32.mrf.mxu0
    %v962 = vadd.f32 %v849, %v961
    %v963 = vpop.f32.mrf.mxu0
    %964 = vmatprep.mubr.bf16.mxu0 0
    %965 = vmatmul.mubr.bf16.gmra.mxu0 %v459
    %v966 = vpop.f32.mrf.mxu0
    %v967 = vadd.f32 %v854, %v966
    %v968 = vpop.f32.mrf.mxu0
    %v969 = vpop.f32.mrf.mxu0
    %v970 = vadd.f32 %v857, %v969
    %v971 = vpop.f32.mrf.mxu0
    %972 = vmatprep.mubr.bf16.mxu0 0
    %973 = vmatmul.mubr.bf16.gmra.mxu0 %v460
    %v974 = vpop.f32.mrf.mxu0
    %v975 = vadd.f32 %v862, %v974
    %v976 = vpop.f32.mrf.mxu0
    %v977 = vpop.f32.mrf.mxu0
    %v978 = vadd.f32 %v865, %v977
    %v979 = vpop.f32.mrf.mxu0
    %980 = vdwg.mxu0
    %v982 = vlaneseq
    %v983 = vshrl.u32 %v982, 7
    %v984 = vsub.s32 0, %v983
    %v985 = vrot.slane %v407, %v984
    %v987 = vadd.f32 %v667, %v985
    %v988 = vadd.f32 %v670, %v985
    %v989 = vadd.f32 %v675, %v985
    %v990 = vadd.f32 %v678, %v985
    %v991 = vadd.f32 %v683, %v985
    %v992 = vadd.f32 %v686, %v985
    %v993 = vadd.f32 %v691, %v985
    %v994 = vadd.f32 %v694, %v985
    %v995 = vmul.f32 %v987, 0.2
    %v996 = vmul.f32 %v988, 0.2
    %v997 = vmul.f32 %v989, 0.2
    %v998 = vmul.f32 %v990, 0.2
    %v999 = vmul.f32 %v991, 0.2
    %v1000 = vmul.f32 %v992, 0.2
    %v1001 = vmul.f32 %v993, 0.2
    %v1002 = vmul.f32 %v994, 0.2
    %v1003 = vmax.f32 %v987, %v995
    %v1004 = vmax.f32 %v988, %v996
    %v1005 = vmax.f32 %v989, %v997
    %v1006 = vmax.f32 %v990, %v998
    %v1007 = vmax.f32 %v991, %v999
    %v1008 = vmax.f32 %v992, %v1000
    %v1009 = vmax.f32 %v993, %v1001
    %v1010 = vmax.f32 %v994, %v1002
    %v1011 = vpack.c.bf16 %v1004, %v1003
    %v1012 = vpack.c.bf16 %v1006, %v1005
    %v1013 = vpack.c.bf16 %v1008, %v1007
    %v1014 = vpack.c.bf16 %v1010, %v1009
    %v1015 = vadd.f32 %v951, %v985
    %v1016 = vadd.f32 %v954, %v985
    %v1017 = vadd.f32 %v959, %v985
    %v1018 = vadd.f32 %v962, %v985
    %v1019 = vadd.f32 %v967, %v985
    %v1020 = vadd.f32 %v970, %v985
    %v1021 = vadd.f32 %v975, %v985
    %v1022 = vadd.f32 %v978, %v985
    %v1023 = vmul.f32 %v1015, 0.2
    %v1024 = vmul.f32 %v1016, 0.2
    %v1025 = vmul.f32 %v1017, 0.2
    %v1026 = vmul.f32 %v1018, 0.2
    %v1027 = vmul.f32 %v1019, 0.2
    %v1028 = vmul.f32 %v1020, 0.2
    %v1029 = vmul.f32 %v1021, 0.2
    %v1030 = vmul.f32 %v1022, 0.2
    %v1031 = vmax.f32 %v1015, %v1023
    %v1032 = vmax.f32 %v1016, %v1024
    %v1033 = vmax.f32 %v1017, %v1025
    %v1034 = vmax.f32 %v1018, %v1026
    %v1035 = vmax.f32 %v1019, %v1027
    %v1036 = vmax.f32 %v1020, %v1028
    %v1037 = vmax.f32 %v1021, %v1029
    %v1038 = vmax.f32 %v1022, %v1030
    %v1039 = vpack.c.bf16 %v1032, %v1031
    %v1040 = vpack.c.bf16 %v1034, %v1033
    %v1041 = vpack.c.bf16 %v1036, %v1035
    %v1042 = vpack.c.bf16 %v1038, %v1037
    %v1044 = vunpack.c.l.b16 %v1011
    %v1045 = vunpack.c.h.b16 %v1011
    %v1046 = vpack.c.b16 %v1044, %v1044
    %v1047 = vpack.c.b16 %v1045, %v1045
    %1050 = vst [vmem:[#allocation3 + $0x8] sm:$0xf] %v1046
    %1051 = vst [vmem:[#allocation3 + $0xc] sm:$0xf] %v1047
    %v1053 = vunpack.c.l.b16 %v1039
    %v1054 = vunpack.c.h.b16 %v1039
    %v1055 = vpack.c.b16 %v1053, %v1053
    %v1056 = vpack.c.b16 %v1054, %v1054
    %1059 = vst [vmem:[#allocation3 + $0x10] sm:$0xf] %v1055
    %1060 = vst [vmem:[#allocation3 + $0x14] sm:$0xf] %v1056
    %v1062 = vunpack.c.l.b16 %v1012
    %v1063 = vunpack.c.h.b16 %v1012
    %v1064 = vpack.c.b16 %v1062, %v1062
    %v1065 = vpack.c.b16 %v1063, %v1063
    %1068 = vst [vmem:[#allocation3 + $0x18] sm:$0xf] %v1064
    %1069 = vst [vmem:[#allocation3 + $0x1c] sm:$0xf] %v1065
    %v1071 = vunpack.c.l.b16 %v1040
    %v1072 = vunpack.c.h.b16 %v1040
    %v1073 = vpack.c.b16 %v1071, %v1071
    %v1074 = vpack.c.b16 %v1072, %v1072
    %1077 = vst [vmem:[#allocation3 + $0x20] sm:$0xf] %v1073
    %1078 = vst [vmem:[#allocation3 + $0x24] sm:$0xf] %v1074
    %v1080 = vunpack.c.l.b16 %v1013
    %v1081 = vunpack.c.h.b16 %v1013
    %v1082 = vpack.c.b16 %v1080, %v1080
    %v1083 = vpack.c.b16 %v1081, %v1081
    %1086 = vst [vmem:[#allocation3 + $0x28] sm:$0xf] %v1082
    %1087 = vst [vmem:[#allocation3 + $0x2c] sm:$0xf] %v1083
    %v1089 = vunpack.c.l.b16 %v1041
    %v1090 = vunpack.c.h.b16 %v1041
    %v1091 = vpack.c.b16 %v1089, %v1089
    %v1092 = vpack.c.b16 %v1090, %v1090
    %1095 = vst [vmem:[#allocation3 + $0x30] sm:$0xf] %v1091
    %1096 = vst [vmem:[#allocation3 + $0x34] sm:$0xf] %v1092
    %v1098 = vunpack.c.l.b16 %v1014
    %v1099 = vunpack.c.h.b16 %v1014
    %v1100 = vpack.c.b16 %v1098, %v1098
    %v1101 = vpack.c.b16 %v1099, %v1099
    %1104 = vst [vmem:[#allocation3 + $0x38] sm:$0xf] %v1100
    %1105 = vst [vmem:[#allocation3 + $0x3c] sm:$0xf] %v1101
    %v1107 = vunpack.c.l.b16 %v1042
    %v1108 = vunpack.c.h.b16 %v1042
    %v1109 = vpack.c.b16 %v1107, %v1107
    %v1110 = vpack.c.b16 %v1108, %v1108
    %1113 = vst [vmem:[#allocation3 + $0x40] sm:$0xf] %v1109
    %1114 = vst [vmem:[#allocation3 + $0x44] sm:$0xf] %v1110
    %v1115 = vld [vmem:[#allocation3] sm:$0xf]
    %v1116 = vld [vmem:[#allocation3 + $0x4] sm:$0xf]
    %v1117 = vld [vmem:[#allocation3 + $0x8] sm:$0xf]
    %v1118 = vld [vmem:[#allocation3 + $0xc] sm:$0xf]
    %v1119 = vld [vmem:[#allocation3 + $0x10] sm:$0xf]
    %v1120 = vld [vmem:[#allocation3 + $0x14] sm:$0xf]
    %v1121 = vld [vmem:[#allocation3 + $0x18] sm:$0xf]
    %v1122 = vld [vmem:[#allocation3 + $0x1c] sm:$0xf]
    %v1123 = vld [vmem:[#allocation3 + $0x20] sm:$0xf]
    %v1124 = vld [vmem:[#allocation3 + $0x24] sm:$0xf]
    %v1125 = vld [vmem:[#allocation3 + $0x28] sm:$0xf]
    %v1126 = vld [vmem:[#allocation3 + $0x2c] sm:$0xf]
    %v1127 = vld [vmem:[#allocation3 + $0x30] sm:$0xf]
    %v1128 = vld [vmem:[#allocation3 + $0x34] sm:$0xf]
    %v1129 = vld [vmem:[#allocation3 + $0x38] sm:$0xf]
    %v1130 = vld [vmem:[#allocation3 + $0x3c] sm:$0xf]
    %v1131 = vld [vmem:[#allocation3 + $0x40] sm:$0xf]
    %v1132 = vld [vmem:[#allocation3 + $0x44] sm:$0xf]
    %v1133 = vld [vmem:[#allocation3 + $0x10] sm:$0xf]
    %v1134 = vld [vmem:[#allocation3 + $0x14] sm:$0xf]
    %v1135 = vld [vmem:[#allocation3 + $0x18] sm:$0xf]
    %v1136 = vld [vmem:[#allocation3 + $0x1c] sm:$0xf]
    %v1137 = vld [vmem:[#allocation3 + $0x20] sm:$0xf]
    %v1138 = vld [vmem:[#allocation3 + $0x24] sm:$0xf]
    %v1139 = vld [vmem:[#allocation3 + $0x28] sm:$0xf]
    %v1140 = vld [vmem:[#allocation3 + $0x2c] sm:$0xf]
    %v1141 = vld [vmem:[#allocation3 + $0x30] sm:$0xf]
    %v1142 = vld [vmem:[#allocation3 + $0x34] sm:$0xf]
    %v1143 = vld [vmem:[#allocation3 + $0x38] sm:$0xf]
    %v1144 = vld [vmem:[#allocation3 + $0x3c] sm:$0xf]
    %v1145 = vld [vmem:[#allocation3 + $0x40] sm:$0xf]
    %v1146 = vld [vmem:[#allocation3 + $0x44] sm:$0xf]
    %v1147 = vld [vmem:[#allocation3 + $0x48] sm:$0xf]
    %v1148 = vld [vmem:[#allocation3 + $0x4c] sm:$0xf]
    %v1149 = vld [vmem:[%s6] sm:$0x1]
    %v1150 = vld [vmem:[#allocation12] sm:$0xf]
    %v1151 = vld [vmem:[#allocation12 + $0x4] sm:$0xf]
    %v1152 = vld [vmem:[#allocation12 + $0x8] sm:$0xf]
    %v1153 = vld [vmem:[#allocation12 + $0xc] sm:$0xf]
    %v1154 = vld [vmem:[#allocation12 + $0x10] sm:$0xf]
    %v1155 = vld [vmem:[#allocation12 + $0x14] sm:$0xf]
    %v1156 = vld [vmem:[#allocation12 + $0x18] sm:$0xf]
    %v1157 = vld [vmem:[#allocation12 + $0x1c] sm:$0xf]
    %v1158 = vld [vmem:[#allocation12 + $0x20] sm:$0xf]
    %v1159 = vld [vmem:[#allocation12 + $0x24] sm:$0xf]
    %v1160 = vld [vmem:[#allocation12 + $0x28] sm:$0xf]
    %v1161 = vld [vmem:[#allocation12 + $0x2c] sm:$0xf]
    %v1162 = vld [vmem:[#allocation12 + $0x30] sm:$0xf]
    %v1163 = vld [vmem:[#allocation12 + $0x34] sm:$0xf]
    %v1164 = vld [vmem:[#allocation12 + $0x38] sm:$0xf]
    %v1165 = vld [vmem:[#allocation12 + $0x3c] sm:$0xf]
    %s1166 = scalar_lea.vmem [#allocation12], 64
    %v1167 = vld [vmem:[%s1166] sm:$0xf]
    %v1168 = vld [vmem:[%s1166 + $0x4] sm:$0xf]
    %v1169 = vld [vmem:[%s1166 + $0x8] sm:$0xf]
    %v1170 = vld [vmem:[%s1166 + $0xc] sm:$0xf]
    %v1171 = vld [vmem:[%s1166 + $0x10] sm:$0xf]
    %v1172 = vld [vmem:[%s1166 + $0x14] sm:$0xf]
    %v1173 = vld [vmem:[%s1166 + $0x18] sm:$0xf]
    %v1174 = vld [vmem:[%s1166 + $0x1c] sm:$0xf]
    %v1175 = vld [vmem:[%s1166 + $0x20] sm:$0xf]
    %v1176 = vld [vmem:[%s1166 + $0x24] sm:$0xf]
    %v1177 = vld [vmem:[%s1166 + $0x28] sm:$0xf]
    %v1178 = vld [vmem:[%s1166 + $0x2c] sm:$0xf]
    %v1179 = vld [vmem:[%s1166 + $0x30] sm:$0xf]
    %v1180 = vld [vmem:[%s1166 + $0x34] sm:$0xf]
    %v1181 = vld [vmem:[%s1166 + $0x38] sm:$0xf]
    %v1182 = vld [vmem:[%s1166 + $0x3c] sm:$0xf]
    %v1199 = vunpack.c.l.b16 %v1117
    %v1200 = vunpack.c.l.b16 %v1118
    %v1201 = vunpack.c.l.b16 %v1119
    %v1202 = vunpack.c.l.b16 %v1120
    %v1203 = vunpack.c.l.b16 %v1121
    %v1204 = vunpack.c.l.b16 %v1122
    %v1205 = vunpack.c.l.b16 %v1123
    %v1206 = vunpack.c.l.b16 %v1124
    %v1207 = vunpack.c.l.b16 %v1125
    %v1208 = vunpack.c.l.b16 %v1126
    %v1209 = vunpack.c.l.b16 %v1127
    %v1210 = vunpack.c.l.b16 %v1128
    %v1211 = vunpack.c.l.b16 %v1129
    %v1212 = vunpack.c.l.b16 %v1130
    %v1213 = vunpack.c.l.b16 %v1131
    %v1214 = vunpack.c.l.b16 %v1132
    %v1215 = vpack.c.b16 %v1200, %v1199
    %v1216 = vpack.c.b16 %v1202, %v1201
    %v1217 = vpack.c.b16 %v1204, %v1203
    %v1218 = vpack.c.b16 %v1206, %v1205
    %v1219 = vpack.c.b16 %v1208, %v1207
    %v1220 = vpack.c.b16 %v1210, %v1209
    %v1221 = vpack.c.b16 %v1212, %v1211
    %v1222 = vpack.c.b16 %v1214, %v1213
    %v1247 = vunpack.c.l.b16 %v1167
    %v1248 = vunpack.c.l.b16 %v1168
    %v1249 = vunpack.c.l.b16 %v1169
    %v1250 = vunpack.c.l.b16 %v1170
    %v1251 = vunpack.c.l.b16 %v1171
    %v1252 = vunpack.c.l.b16 %v1172
    %v1253 = vunpack.c.l.b16 %v1173
    %v1254 = vunpack.c.l.b16 %v1174
    %v1255 = vunpack.c.l.b16 %v1175
    %v1256 = vunpack.c.l.b16 %v1176
    %v1257 = vunpack.c.l.b16 %v1177
    %v1258 = vunpack.c.l.b16 %v1178
    %v1259 = vunpack.c.l.b16 %v1179
    %v1260 = vunpack.c.l.b16 %v1180
    %v1261 = vunpack.c.l.b16 %v1181
    %v1262 = vunpack.c.l.b16 %v1182
    %v1263 = vpack.c.b16 %v1248, %v1247
    %v1264 = vpack.c.b16 %v1250, %v1249
    %v1265 = vpack.c.b16 %v1252, %v1251
    %v1266 = vpack.c.b16 %v1254, %v1253
    %v1267 = vpack.c.b16 %v1256, %v1255
    %v1268 = vpack.c.b16 %v1258, %v1257
    %v1269 = vpack.c.b16 %v1260, %v1259
    %v1270 = vpack.c.b16 %v1262, %v1261
    %1279 = vmatprep.subr.bf16.mxu0 0
    %1280 = vmatpush1.bf16.msra.mxu0 %v1270
    %1281 = vmatprep.subr.bf16.mxu0 0
    %1282 = vmatpush1.bf16.msra.mxu0 %v1269
    %1283 = vmatprep.subr.bf16.mxu0 0
    %1284 = vmatpush1.bf16.msra.mxu0 %v1268
    %1285 = vmatprep.subr.bf16.mxu0 0
    %1286 = vmatpush1.bf16.msra.mxu0 %v1267
    %1287 = vmatprep.subr.bf16.mxu0 0
    %1288 = vmatpush1.bf16.msra.mxu0 %v1266
    %1289 = vmatprep.subr.bf16.mxu0 0
    %1290 = vmatpush1.bf16.msra.mxu0 %v1265
    %1291 = vmatprep.subr.bf16.mxu0 0
    %1292 = vmatpush1.bf16.msra.mxu0 %v1264
    %1293 = vmatprep.subr.bf16.mxu0 0
    %1294 = vmatpush1.bf16.msra.mxu0 %v1263
    %1295 = vmatprep.subr.bf16.mxu0 0
    %1296 = vmatpush2.bf16.msra.mxu0 0
    %1297 = vmatprep.subr.bf16.mxu0 0
    %1298 = vmatpush2.bf16.msra.mxu0 0
    %1299 = vmatprep.subr.bf16.mxu0 0
    %1300 = vmatpush2.bf16.msra.mxu0 0
    %1301 = vmatprep.subr.bf16.mxu0 0
    %1302 = vmatpush2.bf16.msra.mxu0 0
    %1303 = vmatprep.subr.bf16.mxu0 0
    %1304 = vmatpush2.bf16.msra.mxu0 0
    %1305 = vmatprep.subr.bf16.mxu0 0
    %1306 = vmatpush2.bf16.msra.mxu0 0
    %1307 = vmatprep.subr.bf16.mxu0 0
    %1308 = vmatpush2.bf16.msra.mxu0 0
    %1309 = vmatprep.subr.bf16.mxu0 0
    %1310 = vmatpush2.bf16.msra.mxu0 0
    %1311 = vmatprep.mubr.bf16.mxu0 0
    %1312 = vmatmul.mubr.bf16.gmra.mxu0 %v1215
    %v1313 = vpop.f32.mrf.mxu0
    %v1314 = vadd.f32 0.0, %v1313
    %v1315 = vpop.f32.mrf.mxu0
    %v1316 = vpop.f32.mrf.mxu0
    %v1317 = vadd.f32 0.0, %v1316
    %v1318 = vpop.f32.mrf.mxu0
    %1319 = vmatprep.mubr.bf16.mxu0 0
    %1320 = vmatmul.mubr.bf16.gmra.mxu0 %v1216
    %v1321 = vpop.f32.mrf.mxu0
    %v1322 = vadd.f32 0.0, %v1321
    %v1323 = vpop.f32.mrf.mxu0
    %v1324 = vpop.f32.mrf.mxu0
    %v1325 = vadd.f32 0.0, %v1324
    %v1326 = vpop.f32.mrf.mxu0
    %1327 = vmatprep.mubr.bf16.mxu0 0
    %1328 = vmatmul.mubr.bf16.gmra.mxu0 %v1217
    %v1329 = vpop.f32.mrf.mxu0
    %v1330 = vadd.f32 0.0, %v1329
    %v1331 = vpop.f32.mrf.mxu0
    %v1332 = vpop.f32.mrf.mxu0
    %v1333 = vadd.f32 0.0, %v1332
    %v1334 = vpop.f32.mrf.mxu0
    %1335 = vmatprep.mubr.bf16.mxu0 0
    %1336 = vmatmul.mubr.bf16.gmra.mxu0 %v1218
    %v1337 = vpop.f32.mrf.mxu0
    %v1338 = vadd.f32 0.0, %v1337
    %v1339 = vpop.f32.mrf.mxu0
    %v1340 = vpop.f32.mrf.mxu0
    %v1341 = vadd.f32 0.0, %v1340
    %v1342 = vpop.f32.mrf.mxu0
    %1343 = vmatprep.mubr.bf16.mxu0 0
    %1344 = vmatmul.mubr.bf16.gmra.mxu0 %v1219
    %v1345 = vpop.f32.mrf.mxu0
    %v1346 = vadd.f32 0.0, %v1345
    %v1347 = vpop.f32.mrf.mxu0
    %v1348 = vpop.f32.mrf.mxu0
    %v1349 = vadd.f32 0.0, %v1348
    %v1350 = vpop.f32.mrf.mxu0
    %1351 = vmatprep.mubr.bf16.mxu0 0
    %1352 = vmatmul.mubr.bf16.gmra.mxu0 %v1220
    %v1353 = vpop.f32.mrf.mxu0
    %v1354 = vadd.f32 0.0, %v1353
    %v1355 = vpop.f32.mrf.mxu0
    %v1356 = vpop.f32.mrf.mxu0
    %v1357 = vadd.f32 0.0, %v1356
    %v1358 = vpop.f32.mrf.mxu0
    %1359 = vmatprep.mubr.bf16.mxu0 0
    %1360 = vmatmul.mubr.bf16.gmra.mxu0 %v1221
    %v1361 = vpop.f32.mrf.mxu0
    %v1362 = vadd.f32 0.0, %v1361
    %v1363 = vpop.f32.mrf.mxu0
    %v1364 = vpop.f32.mrf.mxu0
    %v1365 = vadd.f32 0.0, %v1364
    %v1366 = vpop.f32.mrf.mxu0
    %1367 = vmatprep.mubr.bf16.mxu0 0
    %1368 = vmatmul.mubr.bf16.gmra.mxu0 %v1222
    %v1369 = vpop.f32.mrf.mxu0
    %v1370 = vadd.f32 0.0, %v1369
    %v1371 = vpop.f32.mrf.mxu0
    %v1372 = vpop.f32.mrf.mxu0
    %v1373 = vadd.f32 0.0, %v1372
    %v1374 = vpop.f32.mrf.mxu0
    %1375 = vdwg.mxu0
    %v1378 = vunpack.c.l.b16 %v1115
    %v1379 = vunpack.c.l.b16 %v1116
    %v1380 = vpack.c.b16 %v1379, %v1378
    %v1398 = vunpack.c.l.b16 %v1150
    %v1399 = vunpack.c.l.b16 %v1151
    %v1400 = vunpack.c.l.b16 %v1152
    %v1401 = vunpack.c.l.b16 %v1153
    %v1402 = vunpack.c.l.b16 %v1154
    %v1403 = vunpack.c.l.b16 %v1155
    %v1404 = vunpack.c.l.b16 %v1156
    %v1405 = vunpack.c.l.b16 %v1157
    %v1406 = vunpack.c.l.b16 %v1158
    %v1407 = vunpack.c.l.b16 %v1159
    %v1408 = vunpack.c.l.b16 %v1160
    %v1409 = vunpack.c.l.b16 %v1161
    %v1410 = vunpack.c.l.b16 %v1162
    %v1411 = vunpack.c.l.b16 %v1163
    %v1412 = vunpack.c.l.b16 %v1164
    %v1413 = vunpack.c.l.b16 %v1165
    %v1414 = vpack.c.b16 %v1399, %v1398
    %v1415 = vpack.c.b16 %v1401, %v1400
    %v1416 = vpack.c.b16 %v1403, %v1402
    %v1417 = vpack.c.b16 %v1405, %v1404
    %v1418 = vpack.c.b16 %v1407, %v1406
    %v1419 = vpack.c.b16 %v1409, %v1408
    %v1420 = vpack.c.b16 %v1411, %v1410
    %v1421 = vpack.c.b16 %v1413, %v1412
    %1430 = vmatprep.subr.bf16.mxu0 0
    %1431 = vmatpush1.bf16.msra.mxu0 %v1421
    %1432 = vmatprep.subr.bf16.mxu0 0
    %1433 = vmatpush1.bf16.msra.mxu0 %v1420
    %1434 = vmatprep.subr.bf16.mxu0 0
    %1435 = vmatpush1.bf16.msra.mxu0 %v1419
    %1436 = vmatprep.subr.bf16.mxu0 0
    %1437 = vmatpush1.bf16.msra.mxu0 %v1418
    %1438 = vmatprep.subr.bf16.mxu0 0
    %1439 = vmatpush1.bf16.msra.mxu0 %v1417
    %1440 = vmatprep.subr.bf16.mxu0 0
    %1441 = vmatpush1.bf16.msra.mxu0 %v1416
    %1442 = vmatprep.subr.bf16.mxu0 0
    %1443 = vmatpush1.bf16.msra.mxu0 %v1415
    %1444 = vmatprep.subr.bf16.mxu0 0
    %1445 = vmatpush1.bf16.msra.mxu0 %v1414
    %1446 = vmatprep.subr.bf16.mxu0 0
    %1447 = vmatpush2.bf16.msra.mxu0 0
    %1448 = vmatprep.subr.bf16.mxu0 0
    %1449 = vmatpush2.bf16.msra.mxu0 0
    %1450 = vmatprep.subr.bf16.mxu0 0
    %1451 = vmatpush2.bf16.msra.mxu0 0
    %1452 = vmatprep.subr.bf16.mxu0 0
    %1453 = vmatpush2.bf16.msra.mxu0 0
    %1454 = vmatprep.subr.bf16.mxu0 0
    %1455 = vmatpush2.bf16.msra.mxu0 0
    %1456 = vmatprep.subr.bf16.mxu0 0
    %1457 = vmatpush2.bf16.msra.mxu0 0
    %1458 = vmatprep.subr.bf16.mxu0 0
    %1459 = vmatpush2.bf16.msra.mxu0 0
    %1460 = vmatprep.subr.bf16.mxu0 0
    %1461 = vmatpush2.bf16.msra.mxu0 0
    %1462 = vmatprep.mubr.bf16.mxu0 0
    %1463 = vmatmul.mubr.bf16.gmra.mxu0 %v1380
    %v1464 = vpop.f32.mrf.mxu0
    %v1465 = vadd.f32 %v1314, %v1464
    %v1466 = vpop.f32.mrf.mxu0
    %v1467 = vpop.f32.mrf.mxu0
    %v1468 = vadd.f32 %v1317, %v1467
    %v1469 = vpop.f32.mrf.mxu0
    %1470 = vmatprep.mubr.bf16.mxu0 0
    %1471 = vmatmul.mubr.bf16.gmra.mxu0 %v1215
    %v1472 = vpop.f32.mrf.mxu0
    %v1473 = vadd.f32 %v1322, %v1472
    %v1474 = vpop.f32.mrf.mxu0
    %v1475 = vpop.f32.mrf.mxu0
    %v1476 = vadd.f32 %v1325, %v1475
    %v1477 = vpop.f32.mrf.mxu0
    %1478 = vmatprep.mubr.bf16.mxu0 0
    %1479 = vmatmul.mubr.bf16.gmra.mxu0 %v1216
    %v1480 = vpop.f32.mrf.mxu0
    %v1481 = vadd.f32 %v1330, %v1480
    %v1482 = vpop.f32.mrf.mxu0
    %v1483 = vpop.f32.mrf.mxu0
    %v1484 = vadd.f32 %v1333, %v1483
    %v1485 = vpop.f32.mrf.mxu0
    %1486 = vmatprep.mubr.bf16.mxu0 0
    %1487 = vmatmul.mubr.bf16.gmra.mxu0 %v1217
    %v1488 = vpop.f32.mrf.mxu0
    %v1489 = vadd.f32 %v1338, %v1488
    %v1490 = vpop.f32.mrf.mxu0
    %v1491 = vpop.f32.mrf.mxu0
    %v1492 = vadd.f32 %v1341, %v1491
    %v1493 = vpop.f32.mrf.mxu0
    %1494 = vmatprep.mubr.bf16.mxu0 0
    %1495 = vmatmul.mubr.bf16.gmra.mxu0 %v1218
    %v1496 = vpop.f32.mrf.mxu0
    %v1497 = vadd.f32 %v1346, %v1496
    %v1498 = vpop.f32.mrf.mxu0
    %v1499 = vpop.f32.mrf.mxu0
    %v1500 = vadd.f32 %v1349, %v1499
    %v1501 = vpop.f32.mrf.mxu0
    %1502 = vmatprep.mubr.bf16.mxu0 0
    %1503 = vmatmul.mubr.bf16.gmra.mxu0 %v1219
    %v1504 = vpop.f32.mrf.mxu0
    %v1505 = vadd.f32 %v1354, %v1504
    %v1506 = vpop.f32.mrf.mxu0
    %v1507 = vpop.f32.mrf.mxu0
    %v1508 = vadd.f32 %v1357, %v1507
    %v1509 = vpop.f32.mrf.mxu0
    %1510 = vmatprep.mubr.bf16.mxu0 0
    %1511 = vmatmul.mubr.bf16.gmra.mxu0 %v1220
    %v1512 = vpop.f32.mrf.mxu0
    %v1513 = vadd.f32 %v1362, %v1512
    %v1514 = vpop.f32.mrf.mxu0
    %v1515 = vpop.f32.mrf.mxu0
    %v1516 = vadd.f32 %v1365, %v1515
    %v1517 = vpop.f32.mrf.mxu0
    %1518 = vmatprep.mubr.bf16.mxu0 0
    %1519 = vmatmul.mubr.bf16.gmra.mxu0 %v1221
    %v1520 = vpop.f32.mrf.mxu0
    %v1521 = vadd.f32 %v1370, %v1520
    %v1522 = vpop.f32.mrf.mxu0
    %v1523 = vpop.f32.mrf.mxu0
    %v1524 = vadd.f32 %v1373, %v1523
    %v1525 = vpop.f32.mrf.mxu0
    %1526 = vdwg.mxu0
    %s1527 = scalar_lea.vmem [#allocation12], 128
    %v1528 = vld [vmem:[%s1527] sm:$0xf]
    %v1529 = vld [vmem:[%s1527 + $0x4] sm:$0xf]
    %v1530 = vld [vmem:[%s1527 + $0x8] sm:$0xf]
    %v1531 = vld [vmem:[%s1527 + $0xc] sm:$0xf]
    %v1532 = vld [vmem:[%s1527 + $0x10] sm:$0xf]
    %v1533 = vld [vmem:[%s1527 + $0x14] sm:$0xf]
    %v1534 = vld [vmem:[%s1527 + $0x18] sm:$0xf]
    %v1535 = vld [vmem:[%s1527 + $0x1c] sm:$0xf]
    %v1536 = vld [vmem:[%s1527 + $0x20] sm:$0xf]
    %v1537 = vld [vmem:[%s1527 + $0x24] sm:$0xf]
    %v1538 = vld [vmem:[%s1527 + $0x28] sm:$0xf]
    %v1539 = vld [vmem:[%s1527 + $0x2c] sm:$0xf]
    %v1540 = vld [vmem:[%s1527 + $0x30] sm:$0xf]
    %v1541 = vld [vmem:[%s1527 + $0x34] sm:$0xf]
    %v1542 = vld [vmem:[%s1527 + $0x38] sm:$0xf]
    %v1543 = vld [vmem:[%s1527 + $0x3c] sm:$0xf]
    %s1544 = scalar_lea.vmem [#allocation12], 192
    %v1545 = vld [vmem:[%s1544] sm:$0xf]
    %v1546 = vld [vmem:[%s1544 + $0x4] sm:$0xf]
    %v1547 = vld [vmem:[%s1544 + $0x8] sm:$0xf]
    %v1548 = vld [vmem:[%s1544 + $0xc] sm:$0xf]
    %v1549 = vld [vmem:[%s1544 + $0x10] sm:$0xf]
    %v1550 = vld [vmem:[%s1544 + $0x14] sm:$0xf]
    %v1551 = vld [vmem:[%s1544 + $0x18] sm:$0xf]
    %v1552 = vld [vmem:[%s1544 + $0x1c] sm:$0xf]
    %v1553 = vld [vmem:[%s1544 + $0x20] sm:$0xf]
    %v1554 = vld [vmem:[%s1544 + $0x24] sm:$0xf]
    %v1555 = vld [vmem:[%s1544 + $0x28] sm:$0xf]
    %v1556 = vld [vmem:[%s1544 + $0x2c] sm:$0xf]
    %v1557 = vld [vmem:[%s1544 + $0x30] sm:$0xf]
    %v1558 = vld [vmem:[%s1544 + $0x34] sm:$0xf]
    %v1559 = vld [vmem:[%s1544 + $0x38] sm:$0xf]
    %v1560 = vld [vmem:[%s1544 + $0x3c] sm:$0xf]
    %v1577 = vunpack.c.l.b16 %v1133
    %v1578 = vunpack.c.l.b16 %v1134
    %v1579 = vunpack.c.l.b16 %v1135
    %v1580 = vunpack.c.l.b16 %v1136
    %v1581 = vunpack.c.l.b16 %v1137
    %v1582 = vunpack.c.l.b16 %v1138
    %v1583 = vunpack.c.l.b16 %v1139
    %v1584 = vunpack.c.l.b16 %v1140
    %v1585 = vunpack.c.l.b16 %v1141
    %v1586 = vunpack.c.l.b16 %v1142
    %v1587 = vunpack.c.l.b16 %v1143
    %v1588 = vunpack.c.l.b16 %v1144
    %v1589 = vunpack.c.l.b16 %v1145
    %v1590 = vunpack.c.l.b16 %v1146
    %v1591 = vunpack.c.l.b16 %v1147
    %v1592 = vunpack.c.l.b16 %v1148
    %v1593 = vpack.c.b16 %v1578, %v1577
    %v1594 = vpack.c.b16 %v1580, %v1579
    %v1595 = vpack.c.b16 %v1582, %v1581
    %v1596 = vpack.c.b16 %v1584, %v1583
    %v1597 = vpack.c.b16 %v1586, %v1585
    %v1598 = vpack.c.b16 %v1588, %v1587
    %v1599 = vpack.c.b16 %v1590, %v1589
    %v1600 = vpack.c.b16 %v1592, %v1591
    %v1625 = vunpack.c.l.b16 %v1545
    %v1626 = vunpack.c.l.b16 %v1546
    %v1627 = vunpack.c.l.b16 %v1547
    %v1628 = vunpack.c.l.b16 %v1548
    %v1629 = vunpack.c.l.b16 %v1549
    %v1630 = vunpack.c.l.b16 %v1550
    %v1631 = vunpack.c.l.b16 %v1551
    %v1632 = vunpack.c.l.b16 %v1552
    %v1633 = vunpack.c.l.b16 %v1553
    %v1634 = vunpack.c.l.b16 %v1554
    %v1635 = vunpack.c.l.b16 %v1555
    %v1636 = vunpack.c.l.b16 %v1556
    %v1637 = vunpack.c.l.b16 %v1557
    %v1638 = vunpack.c.l.b16 %v1558
    %v1639 = vunpack.c.l.b16 %v1559
    %v1640 = vunpack.c.l.b16 %v1560
    %v1641 = vpack.c.b16 %v1626, %v1625
    %v1642 = vpack.c.b16 %v1628, %v1627
    %v1643 = vpack.c.b16 %v1630, %v1629
    %v1644 = vpack.c.b16 %v1632, %v1631
    %v1645 = vpack.c.b16 %v1634, %v1633
    %v1646 = vpack.c.b16 %v1636, %v1635
    %v1647 = vpack.c.b16 %v1638, %v1637
    %v1648 = vpack.c.b16 %v1640, %v1639
    %1657 = vmatprep.subr.bf16.mxu0 0
    %1658 = vmatpush1.bf16.msra.mxu0 %v1648
    %1659 = vmatprep.subr.bf16.mxu0 0
    %1660 = vmatpush1.bf16.msra.mxu0 %v1647
    %1661 = vmatprep.subr.bf16.mxu0 0
    %1662 = vmatpush1.bf16.msra.mxu0 %v1646
    %1663 = vmatprep.subr.bf16.mxu0 0
    %1664 = vmatpush1.bf16.msra.mxu0 %v1645
    %1665 = vmatprep.subr.bf16.mxu0 0
    %1666 = vmatpush1.bf16.msra.mxu0 %v1644
    %1667 = vmatprep.subr.bf16.mxu0 0
    %1668 = vmatpush1.bf16.msra.mxu0 %v1643
    %1669 = vmatprep.subr.bf16.mxu0 0
    %1670 = vmatpush1.bf16.msra.mxu0 %v1642
    %1671 = vmatprep.subr.bf16.mxu0 0
    %1672 = vmatpush1.bf16.msra.mxu0 %v1641
    %1673 = vmatprep.subr.bf16.mxu0 0
    %1674 = vmatpush2.bf16.msra.mxu0 0
    %1675 = vmatprep.subr.bf16.mxu0 0
    %1676 = vmatpush2.bf16.msra.mxu0 0
    %1677 = vmatprep.subr.bf16.mxu0 0
    %1678 = vmatpush2.bf16.msra.mxu0 0
    %1679 = vmatprep.subr.bf16.mxu0 0
    %1680 = vmatpush2.bf16.msra.mxu0 0
    %1681 = vmatprep.subr.bf16.mxu0 0
    %1682 = vmatpush2.bf16.msra.mxu0 0
    %1683 = vmatprep.subr.bf16.mxu0 0
    %1684 = vmatpush2.bf16.msra.mxu0 0
    %1685 = vmatprep.subr.bf16.mxu0 0
    %1686 = vmatpush2.bf16.msra.mxu0 0
    %1687 = vmatprep.subr.bf16.mxu0 0
    %1688 = vmatpush2.bf16.msra.mxu0 0
    %1689 = vmatprep.mubr.bf16.mxu0 0
    %1690 = vmatmul.mubr.bf16.gmra.mxu0 %v1593
    %v1691 = vpop.f32.mrf.mxu0
    %v1692 = vadd.f32 0.0, %v1691
    %v1693 = vpop.f32.mrf.mxu0
    %v1694 = vpop.f32.mrf.mxu0
    %v1695 = vadd.f32 0.0, %v1694
    %v1696 = vpop.f32.mrf.mxu0
    %1697 = vmatprep.mubr.bf16.mxu0 0
    %1698 = vmatmul.mubr.bf16.gmra.mxu0 %v1594
    %v1699 = vpop.f32.mrf.mxu0
    %v1700 = vadd.f32 0.0, %v1699
    %v1701 = vpop.f32.mrf.mxu0
    %v1702 = vpop.f32.mrf.mxu0
    %v1703 = vadd.f32 0.0, %v1702
    %v1704 = vpop.f32.mrf.mxu0
    %1705 = vmatprep.mubr.bf16.mxu0 0
    %1706 = vmatmul.mubr.bf16.gmra.mxu0 %v1595
    %v1707 = vpop.f32.mrf.mxu0
    %v1708 = vadd.f32 0.0, %v1707
    %v1709 = vpop.f32.mrf.mxu0
    %v1710 = vpop.f32.mrf.mxu0
    %v1711 = vadd.f32 0.0, %v1710
    %v1712 = vpop.f32.mrf.mxu0
    %1713 = vmatprep.mubr.bf16.mxu0 0
    %1714 = vmatmul.mubr.bf16.gmra.mxu0 %v1596
    %v1715 = vpop.f32.mrf.mxu0
    %v1716 = vadd.f32 0.0, %v1715
    %v1717 = vpop.f32.mrf.mxu0
    %v1718 = vpop.f32.mrf.mxu0
    %v1719 = vadd.f32 0.0, %v1718
    %v1720 = vpop.f32.mrf.mxu0
    %1721 = vmatprep.mubr.bf16.mxu0 0
    %1722 = vmatmul.mubr.bf16.gmra.mxu0 %v1597
    %v1723 = vpop.f32.mrf.mxu0
    %v1724 = vadd.f32 0.0, %v1723
    %v1725 = vpop.f32.mrf.mxu0
    %v1726 = vpop.f32.mrf.mxu0
    %v1727 = vadd.f32 0.0, %v1726
    %v1728 = vpop.f32.mrf.mxu0
    %1729 = vmatprep.mubr.bf16.mxu0 0
    %1730 = vmatmul.mubr.bf16.gmra.mxu0 %v1598
    %v1731 = vpop.f32.mrf.mxu0
    %v1732 = vadd.f32 0.0, %v1731
    %v1733 = vpop.f32.mrf.mxu0
    %v1734 = vpop.f32.mrf.mxu0
    %v1735 = vadd.f32 0.0, %v1734
    %v1736 = vpop.f32.mrf.mxu0
    %1737 = vmatprep.mubr.bf16.mxu0 0
    %1738 = vmatmul.mubr.bf16.gmra.mxu0 %v1599
    %v1739 = vpop.f32.mrf.mxu0
    %v1740 = vadd.f32 0.0, %v1739
    %v1741 = vpop.f32.mrf.mxu0
    %v1742 = vpop.f32.mrf.mxu0
    %v1743 = vadd.f32 0.0, %v1742
    %v1744 = vpop.f32.mrf.mxu0
    %1745 = vmatprep.mubr.bf16.mxu0 0
    %1746 = vmatmul.mubr.bf16.gmra.mxu0 %v1600
    %v1747 = vpop.f32.mrf.mxu0
    %v1748 = vadd.f32 0.0, %v1747
    %v1749 = vpop.f32.mrf.mxu0
    %v1750 = vpop.f32.mrf.mxu0
    %v1751 = vadd.f32 0.0, %v1750
    %v1752 = vpop.f32.mrf.mxu0
    %1753 = vdwg.mxu0
    %v1770 = vunpack.c.l.b16 %v1528
    %v1771 = vunpack.c.l.b16 %v1529
    %v1772 = vunpack.c.l.b16 %v1530
    %v1773 = vunpack.c.l.b16 %v1531
    %v1774 = vunpack.c.l.b16 %v1532
    %v1775 = vunpack.c.l.b16 %v1533
    %v1776 = vunpack.c.l.b16 %v1534
    %v1777 = vunpack.c.l.b16 %v1535
    %v1778 = vunpack.c.l.b16 %v1536
    %v1779 = vunpack.c.l.b16 %v1537
    %v1780 = vunpack.c.l.b16 %v1538
    %v1781 = vunpack.c.l.b16 %v1539
    %v1782 = vunpack.c.l.b16 %v1540
    %v1783 = vunpack.c.l.b16 %v1541
    %v1784 = vunpack.c.l.b16 %v1542
    %v1785 = vunpack.c.l.b16 %v1543
    %v1786 = vpack.c.b16 %v1771, %v1770
    %v1787 = vpack.c.b16 %v1773, %v1772
    %v1788 = vpack.c.b16 %v1775, %v1774
    %v1789 = vpack.c.b16 %v1777, %v1776
    %v1790 = vpack.c.b16 %v1779, %v1778
    %v1791 = vpack.c.b16 %v1781, %v1780
    %v1792 = vpack.c.b16 %v1783, %v1782
    %v1793 = vpack.c.b16 %v1785, %v1784
    %1802 = vmatprep.subr.bf16.mxu0 0
    %1803 = vmatpush1.bf16.msra.mxu0 %v1793
    %1804 = vmatprep.subr.bf16.mxu0 0
    %1805 = vmatpush1.bf16.msra.mxu0 %v1792
    %1806 = vmatprep.subr.bf16.mxu0 0
    %1807 = vmatpush1.bf16.msra.mxu0 %v1791
    %1808 = vmatprep.subr.bf16.mxu0 0
    %1809 = vmatpush1.bf16.msra.mxu0 %v1790
    %1810 = vmatprep.subr.bf16.mxu0 0
    %1811 = vmatpush1.bf16.msra.mxu0 %v1789
    %1812 = vmatprep.subr.bf16.mxu0 0
    %1813 = vmatpush1.bf16.msra.mxu0 %v1788
    %1814 = vmatprep.subr.bf16.mxu0 0
    %1815 = vmatpush1.bf16.msra.mxu0 %v1787
    %1816 = vmatprep.subr.bf16.mxu0 0
    %1817 = vmatpush1.bf16.msra.mxu0 %v1786
    %1818 = vmatprep.subr.bf16.mxu0 0
    %1819 = vmatpush2.bf16.msra.mxu0 0
    %1820 = vmatprep.subr.bf16.mxu0 0
    %1821 = vmatpush2.bf16.msra.mxu0 0
    %1822 = vmatprep.subr.bf16.mxu0 0
    %1823 = vmatpush2.bf16.msra.mxu0 0
    %1824 = vmatprep.subr.bf16.mxu0 0
    %1825 = vmatpush2.bf16.msra.mxu0 0
    %1826 = vmatprep.subr.bf16.mxu0 0
    %1827 = vmatpush2.bf16.msra.mxu0 0
    %1828 = vmatprep.subr.bf16.mxu0 0
    %1829 = vmatpush2.bf16.msra.mxu0 0
    %1830 = vmatprep.subr.bf16.mxu0 0
    %1831 = vmatpush2.bf16.msra.mxu0 0
    %1832 = vmatprep.subr.bf16.mxu0 0
    %1833 = vmatpush2.bf16.msra.mxu0 0
    %1834 = vmatprep.mubr.bf16.mxu0 0
    %1835 = vmatmul.mubr.bf16.gmra.mxu0 %v1215
    %v1836 = vpop.f32.mrf.mxu0
    %v1837 = vadd.f32 %v1692, %v1836
    %v1838 = vpop.f32.mrf.mxu0
    %v1839 = vpop.f32.mrf.mxu0
    %v1840 = vadd.f32 %v1695, %v1839
    %v1841 = vpop.f32.mrf.mxu0
    %1842 = vmatprep.mubr.bf16.mxu0 0
    %1843 = vmatmul.mubr.bf16.gmra.mxu0 %v1216
    %v1844 = vpop.f32.mrf.mxu0
    %v1845 = vadd.f32 %v1700, %v1844
    %v1846 = vpop.f32.mrf.mxu0
    %v1847 = vpop.f32.mrf.mxu0
    %v1848 = vadd.f32 %v1703, %v1847
    %v1849 = vpop.f32.mrf.mxu0
    %1850 = vmatprep.mubr.bf16.mxu0 0
    %1851 = vmatmul.mubr.bf16.gmra.mxu0 %v1217
    %v1852 = vpop.f32.mrf.mxu0
    %v1853 = vadd.f32 %v1708, %v1852
    %v1854 = vpop.f32.mrf.mxu0
    %v1855 = vpop.f32.mrf.mxu0
    %v1856 = vadd.f32 %v1711, %v1855
    %v1857 = vpop.f32.mrf.mxu0
    %1858 = vmatprep.mubr.bf16.mxu0 0
    %1859 = vmatmul.mubr.bf16.gmra.mxu0 %v1218
    %v1860 = vpop.f32.mrf.mxu0
    %v1861 = vadd.f32 %v1716, %v1860
    %v1862 = vpop.f32.mrf.mxu0
    %v1863 = vpop.f32.mrf.mxu0
    %v1864 = vadd.f32 %v1719, %v1863
    %v1865 = vpop.f32.mrf.mxu0
    %1866 = vmatprep.mubr.bf16.mxu0 0
    %1867 = vmatmul.mubr.bf16.gmra.mxu0 %v1219
    %v1868 = vpop.f32.mrf.mxu0
    %v1869 = vadd.f32 %v1724, %v1868
    %v1870 = vpop.f32.mrf.mxu0
    %v1871 = vpop.f32.mrf.mxu0
    %v1872 = vadd.f32 %v1727, %v1871
    %v1873 = vpop.f32.mrf.mxu0
    %1874 = vmatprep.mubr.bf16.mxu0 0
    %1875 = vmatmul.mubr.bf16.gmra.mxu0 %v1220
    %v1876 = vpop.f32.mrf.mxu0
    %v1877 = vadd.f32 %v1732, %v1876
    %v1878 = vpop.f32.mrf.mxu0
    %v1879 = vpop.f32.mrf.mxu0
    %v1880 = vadd.f32 %v1735, %v1879
    %v1881 = vpop.f32.mrf.mxu0
    %1882 = vmatprep.mubr.bf16.mxu0 0
    %1883 = vmatmul.mubr.bf16.gmra.mxu0 %v1221
    %v1884 = vpop.f32.mrf.mxu0
    %v1885 = vadd.f32 %v1740, %v1884
    %v1886 = vpop.f32.mrf.mxu0
    %v1887 = vpop.f32.mrf.mxu0
    %v1888 = vadd.f32 %v1743, %v1887
    %v1889 = vpop.f32.mrf.mxu0
    %1890 = vmatprep.mubr.bf16.mxu0 0
    %1891 = vmatmul.mubr.bf16.gmra.mxu0 %v1222
    %v1892 = vpop.f32.mrf.mxu0
    %v1893 = vadd.f32 %v1748, %v1892
    %v1894 = vpop.f32.mrf.mxu0
    %v1895 = vpop.f32.mrf.mxu0
    %v1896 = vadd.f32 %v1751, %v1895
    %v1897 = vpop.f32.mrf.mxu0
    %1898 = vdwg.mxu0
    %v1900 = vlaneseq
    %v1901 = vshrl.u32 %v1900, 7
    %v1902 = vsub.s32 0, %v1901
    %v1903 = vrot.slane %v1149, %v1902
    %v1905 = vadd.f32 %v1465, %v1903
    %v1906 = vadd.f32 %v1468, %v1903
    %v1907 = vadd.f32 %v1473, %v1903
    %v1908 = vadd.f32 %v1476, %v1903
    %v1909 = vadd.f32 %v1481, %v1903
    %v1910 = vadd.f32 %v1484, %v1903
    %v1911 = vadd.f32 %v1489, %v1903
    %v1912 = vadd.f32 %v1492, %v1903
    %v1913 = vadd.f32 %v1497, %v1903
    %v1914 = vadd.f32 %v1500, %v1903
    %v1915 = vadd.f32 %v1505, %v1903
    %v1916 = vadd.f32 %v1508, %v1903
    %v1917 = vadd.f32 %v1513, %v1903
    %v1918 = vadd.f32 %v1516, %v1903
    %v1919 = vadd.f32 %v1521, %v1903
    %v1920 = vadd.f32 %v1524, %v1903
    %v1921 = vmul.f32 %v1905, 0.2
    %v1922 = vmul.f32 %v1906, 0.2
    %v1923 = vmul.f32 %v1907, 0.2
    %v1924 = vmul.f32 %v1908, 0.2
    %v1925 = vmul.f32 %v1909, 0.2
    %v1926 = vmul.f32 %v1910, 0.2
    %v1927 = vmul.f32 %v1911, 0.2
    %v1928 = vmul.f32 %v1912, 0.2
    %v1929 = vmul.f32 %v1913, 0.2
    %v1930 = vmul.f32 %v1914, 0.2
    %v1931 = vmul.f32 %v1915, 0.2
    %v1932 = vmul.f32 %v1916, 0.2
    %v1933 = vmul.f32 %v1917, 0.2
    %v1934 = vmul.f32 %v1918, 0.2
    %v1935 = vmul.f32 %v1919, 0.2
    %v1936 = vmul.f32 %v1920, 0.2
    %v1937 = vmax.f32 %v1905, %v1921
    %v1938 = vmax.f32 %v1906, %v1922
    %v1939 = vmax.f32 %v1907, %v1923
    %v1940 = vmax.f32 %v1908, %v1924
    %v1941 = vmax.f32 %v1909, %v1925
    %v1942 = vmax.f32 %v1910, %v1926
    %v1943 = vmax.f32 %v1911, %v1927
    %v1944 = vmax.f32 %v1912, %v1928
    %v1945 = vmax.f32 %v1913, %v1929
    %v1946 = vmax.f32 %v1914, %v1930
    %v1947 = vmax.f32 %v1915, %v1931
    %v1948 = vmax.f32 %v1916, %v1932
    %v1949 = vmax.f32 %v1917, %v1933
    %v1950 = vmax.f32 %v1918, %v1934
    %v1951 = vmax.f32 %v1919, %v1935
    %v1952 = vmax.f32 %v1920, %v1936
    %v1953 = vpack.c.bf16 %v1938, %v1937
    %v1954 = vpack.c.bf16 %v1940, %v1939
    %v1955 = vpack.c.bf16 %v1942, %v1941
    %v1956 = vpack.c.bf16 %v1944, %v1943
    %v1957 = vpack.c.bf16 %v1946, %v1945
    %v1958 = vpack.c.bf16 %v1948, %v1947
    %v1959 = vpack.c.bf16 %v1950, %v1949
    %v1960 = vpack.c.bf16 %v1952, %v1951
    %v1961 = vadd.f32 %v1837, %v1903
    %v1962 = vadd.f32 %v1840, %v1903
    %v1963 = vadd.f32 %v1845, %v1903
    %v1964 = vadd.f32 %v1848, %v1903
    %v1965 = vadd.f32 %v1853, %v1903
    %v1966 = vadd.f32 %v1856, %v1903
    %v1967 = vadd.f32 %v1861, %v1903
    %v1968 = vadd.f32 %v1864, %v1903
    %v1969 = vadd.f32 %v1869, %v1903
    %v1970 = vadd.f32 %v1872, %v1903
    %v1971 = vadd.f32 %v1877, %v1903
    %v1972 = vadd.f32 %v1880, %v1903
    %v1973 = vadd.f32 %v1885, %v1903
    %v1974 = vadd.f32 %v1888, %v1903
    %v1975 = vadd.f32 %v1893, %v1903
    %v1976 = vadd.f32 %v1896, %v1903
    %v1977 = vmul.f32 %v1961, 0.2
    %v1978 = vmul.f32 %v1962, 0.2
    %v1979 = vmul.f32 %v1963, 0.2
    %v1980 = vmul.f32 %v1964, 0.2
    %v1981 = vmul.f32 %v1965, 0.2
    %v1982 = vmul.f32 %v1966, 0.2
    %v1983 = vmul.f32 %v1967, 0.2
    %v1984 = vmul.f32 %v1968, 0.2
    %v1985 = vmul.f32 %v1969, 0.2
    %v1986 = vmul.f32 %v1970, 0.2
    %v1987 = vmul.f32 %v1971, 0.2
    %v1988 = vmul.f32 %v1972, 0.2
    %v1989 = vmul.f32 %v1973, 0.2
    %v1990 = vmul.f32 %v1974, 0.2
    %v1991 = vmul.f32 %v1975, 0.2
    %v1992 = vmul.f32 %v1976, 0.2
    %v1993 = vmax.f32 %v1961, %v1977
    %v1994 = vmax.f32 %v1962, %v1978
    %v1995 = vmax.f32 %v1963, %v1979
    %v1996 = vmax.f32 %v1964, %v1980
    %v1997 = vmax.f32 %v1965, %v1981
    %v1998 = vmax.f32 %v1966, %v1982
    %v1999 = vmax.f32 %v1967, %v1983
    %v2000 = vmax.f32 %v1968, %v1984
    %v2001 = vmax.f32 %v1969, %v1985
    %v2002 = vmax.f32 %v1970, %v1986
    %v2003 = vmax.f32 %v1971, %v1987
    %v2004 = vmax.f32 %v1972, %v1988
    %v2005 = vmax.f32 %v1973, %v1989
    %v2006 = vmax.f32 %v1974, %v1990
    %v2007 = vmax.f32 %v1975, %v1991
    %v2008 = vmax.f32 %v1976, %v1992
    %v2009 = vpack.c.bf16 %v1994, %v1993
    %v2010 = vpack.c.bf16 %v1996, %v1995
    %v2011 = vpack.c.bf16 %v1998, %v1997
    %v2012 = vpack.c.bf16 %v2000, %v1999
    %v2013 = vpack.c.bf16 %v2002, %v2001
    %v2014 = vpack.c.bf16 %v2004, %v2003
    %v2015 = vpack.c.bf16 %v2006, %v2005
    %v2016 = vpack.c.bf16 %v2008, %v2007
    %v2017 = vld [vmem:[#allocation13] sm:$0xf]
    %v2018 = vld [vmem:[#allocation13 + $0x4] sm:$0xf]
    %v2019 = vld [vmem:[#allocation13 + $0x8] sm:$0xf]
    %v2020 = vld [vmem:[#allocation13 + $0xc] sm:$0xf]
    %v2021 = vld [vmem:[#allocation13 + $0x10] sm:$0xf]
    %v2022 = vld [vmem:[#allocation13 + $0x14] sm:$0xf]
    %v2023 = vld [vmem:[#allocation13 + $0x18] sm:$0xf]
    %v2024 = vld [vmem:[#allocation13 + $0x1c] sm:$0xf]
    %v2025 = vld [vmem:[#allocation13 + $0x20] sm:$0xf]
    %v2026 = vld [vmem:[#allocation13 + $0x24] sm:$0xf]
    %v2027 = vld [vmem:[#allocation13 + $0x28] sm:$0xf]
    %v2028 = vld [vmem:[#allocation13 + $0x2c] sm:$0xf]
    %v2029 = vld [vmem:[#allocation13 + $0x30] sm:$0xf]
    %v2030 = vld [vmem:[#allocation13 + $0x34] sm:$0xf]
    %v2031 = vld [vmem:[#allocation13 + $0x38] sm:$0xf]
    %v2032 = vld [vmem:[#allocation13 + $0x3c] sm:$0xf]
    %v2033 = vld [vmem:[%s8] sm:$0x1]
    %v2035 = vlaneseq
    %v2036 = vshrl.u32 %v2035, 7
    %v2037 = vsub.s32 0, %v2036
    %v2038 = vrot.slane %v2033, %v2037
    %v2056 = vunpack.c.l.b16 %v2017
    %v2057 = vunpack.c.l.b16 %v2018
    %v2058 = vunpack.c.l.b16 %v2019
    %v2059 = vunpack.c.l.b16 %v2020
    %v2060 = vunpack.c.l.b16 %v2021
    %v2061 = vunpack.c.l.b16 %v2022
    %v2062 = vunpack.c.l.b16 %v2023
    %v2063 = vunpack.c.l.b16 %v2024
    %v2064 = vunpack.c.l.b16 %v2025
    %v2065 = vunpack.c.l.b16 %v2026
    %v2066 = vunpack.c.l.b16 %v2027
    %v2067 = vunpack.c.l.b16 %v2028
    %v2068 = vunpack.c.l.b16 %v2029
    %v2069 = vunpack.c.l.b16 %v2030
    %v2070 = vunpack.c.l.b16 %v2031
    %v2071 = vunpack.c.l.b16 %v2032
    %v2072 = vpack.c.b16 %v2057, %v2056
    %v2073 = vpack.c.b16 %v2059, %v2058
    %v2074 = vpack.c.b16 %v2061, %v2060
    %v2075 = vpack.c.b16 %v2063, %v2062
    %v2076 = vpack.c.b16 %v2065, %v2064
    %v2077 = vpack.c.b16 %v2067, %v2066
    %v2078 = vpack.c.b16 %v2069, %v2068
    %v2079 = vpack.c.b16 %v2071, %v2070
    %2088 = vmatprep.subr.bf16.mxu0 0
    %2089 = vmatpush1.bf16.msra.mxu0 %v2079
    %2090 = vmatprep.subr.bf16.mxu0 0
    %2091 = vmatpush1.bf16.msra.mxu0 %v2078
    %2092 = vmatprep.subr.bf16.mxu0 0
    %2093 = vmatpush1.bf16.msra.mxu0 %v2077
    %2094 = vmatprep.subr.bf16.mxu0 0
    %2095 = vmatpush1.bf16.msra.mxu0 %v2076
    %2096 = vmatprep.subr.bf16.mxu0 0
    %2097 = vmatpush1.bf16.msra.mxu0 %v2075
    %2098 = vmatprep.subr.bf16.mxu0 0
    %2099 = vmatpush1.bf16.msra.mxu0 %v2074
    %2100 = vmatprep.subr.bf16.mxu0 0
    %2101 = vmatpush1.bf16.msra.mxu0 %v2073
    %2102 = vmatprep.subr.bf16.mxu0 0
    %2103 = vmatpush1.bf16.msra.mxu0 %v2072
    %2104 = vmatprep.subr.bf16.mxu0 0
    %2105 = vmatpush2.bf16.msra.mxu0 0
    %2106 = vmatprep.subr.bf16.mxu0 0
    %2107 = vmatpush2.bf16.msra.mxu0 0
    %2108 = vmatprep.subr.bf16.mxu0 0
    %2109 = vmatpush2.bf16.msra.mxu0 0
    %2110 = vmatprep.subr.bf16.mxu0 0
    %2111 = vmatpush2.bf16.msra.mxu0 0
    %2112 = vmatprep.subr.bf16.mxu0 0
    %2113 = vmatpush2.bf16.msra.mxu0 0
    %2114 = vmatprep.subr.bf16.mxu0 0
    %2115 = vmatpush2.bf16.msra.mxu0 0
    %2116 = vmatprep.subr.bf16.mxu0 0
    %2117 = vmatpush2.bf16.msra.mxu0 0
    %2118 = vmatprep.subr.bf16.mxu0 0
    %2119 = vmatpush2.bf16.msra.mxu0 0
    %2120 = vmatprep.mubr.bf16.mxu0 0
    %2121 = vmatmul.mubr.bf16.gmra.mxu0 %v1953
    %v2122 = vpop.f32.mrf.mxu0
    %v2123 = vadd.f32 %v2038, %v2122
    %v2124 = vpop.f32.mrf.mxu0
    %v2125 = vpop.f32.mrf.mxu0
    %v2126 = vadd.f32 %v2038, %v2125
    %v2127 = vpop.f32.mrf.mxu0
    %2128 = vmatprep.mubr.bf16.mxu0 0
    %2129 = vmatmul.mubr.bf16.gmra.mxu0 %v1954
    %v2130 = vpop.f32.mrf.mxu0
    %v2131 = vadd.f32 %v2038, %v2130
    %v2132 = vpop.f32.mrf.mxu0
    %v2133 = vpop.f32.mrf.mxu0
    %v2134 = vadd.f32 %v2038, %v2133
    %v2135 = vpop.f32.mrf.mxu0
    %2136 = vmatprep.mubr.bf16.mxu0 0
    %2137 = vmatmul.mubr.bf16.gmra.mxu0 %v1955
    %v2138 = vpop.f32.mrf.mxu0
    %v2139 = vadd.f32 %v2038, %v2138
    %v2140 = vpop.f32.mrf.mxu0
    %v2141 = vpop.f32.mrf.mxu0
    %v2142 = vadd.f32 %v2038, %v2141
    %v2143 = vpop.f32.mrf.mxu0
    %2144 = vmatprep.mubr.bf16.mxu0 0
    %2145 = vmatmul.mubr.bf16.gmra.mxu0 %v1956
    %v2146 = vpop.f32.mrf.mxu0
    %v2147 = vadd.f32 %v2038, %v2146
    %v2148 = vpop.f32.mrf.mxu0
    %v2149 = vpop.f32.mrf.mxu0
    %v2150 = vadd.f32 %v2038, %v2149
    %v2151 = vpop.f32.mrf.mxu0
    %2152 = vmatprep.mubr.bf16.mxu0 0
    %2153 = vmatmul.mubr.bf16.gmra.mxu0 %v1957
    %v2154 = vpop.f32.mrf.mxu0
    %v2155 = vadd.f32 %v2038, %v2154
    %v2156 = vpop.f32.mrf.mxu0
    %v2157 = vpop.f32.mrf.mxu0
    %v2158 = vadd.f32 %v2038, %v2157
    %v2159 = vpop.f32.mrf.mxu0
    %2160 = vmatprep.mubr.bf16.mxu0 0
    %2161 = vmatmul.mubr.bf16.gmra.mxu0 %v1958
    %v2162 = vpop.f32.mrf.mxu0
    %v2163 = vadd.f32 %v2038, %v2162
    %v2164 = vpop.f32.mrf.mxu0
    %v2165 = vpop.f32.mrf.mxu0
    %v2166 = vadd.f32 %v2038, %v2165
    %v2167 = vpop.f32.mrf.mxu0
    %2168 = vmatprep.mubr.bf16.mxu0 0
    %2169 = vmatmul.mubr.bf16.gmra.mxu0 %v1959
    %v2170 = vpop.f32.mrf.mxu0
    %v2171 = vadd.f32 %v2038, %v2170
    %v2172 = vpop.f32.mrf.mxu0
    %v2173 = vpop.f32.mrf.mxu0
    %v2174 = vadd.f32 %v2038, %v2173
    %v2175 = vpop.f32.mrf.mxu0
    %2176 = vmatprep.mubr.bf16.mxu0 0
    %2177 = vmatmul.mubr.bf16.gmra.mxu0 %v1960
    %v2178 = vpop.f32.mrf.mxu0
    %v2179 = vadd.f32 %v2038, %v2178
    %v2180 = vpop.f32.mrf.mxu0
    %v2181 = vpop.f32.mrf.mxu0
    %v2182 = vadd.f32 %v2038, %v2181
    %v2183 = vpop.f32.mrf.mxu0
    %2184 = vdwg.mxu0
    %v2185 = vpack.c.bf16 %v2126, %v2123
    %v2186 = vpack.c.bf16 %v2134, %v2131
    %v2187 = vpack.c.bf16 %v2142, %v2139
    %v2188 = vpack.c.bf16 %v2150, %v2147
    %v2189 = vpack.c.bf16 %v2158, %v2155
    %v2190 = vpack.c.bf16 %v2166, %v2163
    %v2191 = vpack.c.bf16 %v2174, %v2171
    %v2192 = vpack.c.bf16 %v2182, %v2179
    %v2201 = vunpack.c.l.b16 %v2185
    %v2202 = vunpack.c.h.b16 %v2185
    %v2203 = vunpack.c.l.b16 %v2186
    %v2204 = vunpack.c.h.b16 %v2186
    %v2205 = vunpack.c.l.b16 %v2187
    %v2206 = vunpack.c.h.b16 %v2187
    %v2207 = vunpack.c.l.b16 %v2188
    %v2208 = vunpack.c.h.b16 %v2188
    %v2209 = vunpack.c.l.b16 %v2189
    %v2210 = vunpack.c.h.b16 %v2189
    %v2211 = vunpack.c.l.b16 %v2190
    %v2212 = vunpack.c.h.b16 %v2190
    %v2213 = vunpack.c.l.b16 %v2191
    %v2214 = vunpack.c.h.b16 %v2191
    %v2215 = vunpack.c.l.b16 %v2192
    %v2216 = vunpack.c.h.b16 %v2192
    %v2217 = vpack.c.b16 %v2201, %v2201
    %v2218 = vpack.c.b16 %v2202, %v2202
    %v2219 = vpack.c.b16 %v2203, %v2203
    %v2220 = vpack.c.b16 %v2204, %v2204
    %v2221 = vpack.c.b16 %v2205, %v2205
    %v2222 = vpack.c.b16 %v2206, %v2206
    %v2223 = vpack.c.b16 %v2207, %v2207
    %v2224 = vpack.c.b16 %v2208, %v2208
    %v2225 = vpack.c.b16 %v2209, %v2209
    %v2226 = vpack.c.b16 %v2210, %v2210
    %v2227 = vpack.c.b16 %v2211, %v2211
    %v2228 = vpack.c.b16 %v2212, %v2212
    %v2229 = vpack.c.b16 %v2213, %v2213
    %v2230 = vpack.c.b16 %v2214, %v2214
    %v2231 = vpack.c.b16 %v2215, %v2215
    %v2232 = vpack.c.b16 %v2216, %v2216
    %2249 = vst [vmem:[#allocation15] sm:$0xf] %v2217
    %2250 = vst [vmem:[#allocation15 + $0x4] sm:$0xf] %v2218
    %2251 = vst [vmem:[#allocation15 + $0x8] sm:$0xf] %v2219
    %2252 = vst [vmem:[#allocation15 + $0xc] sm:$0xf] %v2220
    %2253 = vst [vmem:[#allocation15 + $0x10] sm:$0xf] %v2221
    %2254 = vst [vmem:[#allocation15 + $0x14] sm:$0xf] %v2222
    %2255 = vst [vmem:[#allocation15 + $0x18] sm:$0xf] %v2223
    %2256 = vst [vmem:[#allocation15 + $0x1c] sm:$0xf] %v2224
    %2257 = vst [vmem:[#allocation15 + $0x20] sm:$0xf] %v2225
    %2258 = vst [vmem:[#allocation15 + $0x24] sm:$0xf] %v2226
    %2259 = vst [vmem:[#allocation15 + $0x28] sm:$0xf] %v2227
    %2260 = vst [vmem:[#allocation15 + $0x2c] sm:$0xf] %v2228
    %2261 = vst [vmem:[#allocation15 + $0x30] sm:$0xf] %v2229
    %2262 = vst [vmem:[#allocation15 + $0x34] sm:$0xf] %v2230
    %2263 = vst [vmem:[#allocation15 + $0x38] sm:$0xf] %v2231
    %2264 = vst [vmem:[#allocation15 + $0x3c] sm:$0xf] %v2232
    %2265 = vmatprep.subr.bf16.mxu0 0
    %2266 = vmatpush1.bf16.msra.mxu0 %v2079
    %2267 = vmatprep.subr.bf16.mxu0 0
    %2268 = vmatpush1.bf16.msra.mxu0 %v2078
    %2269 = vmatprep.subr.bf16.mxu0 0
    %2270 = vmatpush1.bf16.msra.mxu0 %v2077
    %2271 = vmatprep.subr.bf16.mxu0 0
    %2272 = vmatpush1.bf16.msra.mxu0 %v2076
    %2273 = vmatprep.subr.bf16.mxu0 0
    %2274 = vmatpush1.bf16.msra.mxu0 %v2075
    %2275 = vmatprep.subr.bf16.mxu0 0
    %2276 = vmatpush1.bf16.msra.mxu0 %v2074
    %2277 = vmatprep.subr.bf16.mxu0 0
    %2278 = vmatpush1.bf16.msra.mxu0 %v2073
    %2279 = vmatprep.subr.bf16.mxu0 0
    %2280 = vmatpush1.bf16.msra.mxu0 %v2072
    %2281 = vmatprep.subr.bf16.mxu0 0
    %2282 = vmatpush2.bf16.msra.mxu0 0
    %2283 = vmatprep.subr.bf16.mxu0 0
    %2284 = vmatpush2.bf16.msra.mxu0 0
    %2285 = vmatprep.subr.bf16.mxu0 0
    %2286 = vmatpush2.bf16.msra.mxu0 0
    %2287 = vmatprep.subr.bf16.mxu0 0
    %2288 = vmatpush2.bf16.msra.mxu0 0
    %2289 = vmatprep.subr.bf16.mxu0 0
    %2290 = vmatpush2.bf16.msra.mxu0 0
    %2291 = vmatprep.subr.bf16.mxu0 0
    %2292 = vmatpush2.bf16.msra.mxu0 0
    %2293 = vmatprep.subr.bf16.mxu0 0
    %2294 = vmatpush2.bf16.msra.mxu0 0
    %2295 = vmatprep.subr.bf16.mxu0 0
    %2296 = vmatpush2.bf16.msra.mxu0 0
    %2297 = vmatprep.mubr.bf16.mxu0 0
    %2298 = vmatmul.mubr.bf16.gmra.mxu0 %v2009
    %v2299 = vpop.f32.mrf.mxu0
    %v2300 = vadd.f32 %v2038, %v2299
    %v2301 = vpop.f32.mrf.mxu0
    %v2302 = vpop.f32.mrf.mxu0
    %v2303 = vadd.f32 %v2038, %v2302
    %v2304 = vpop.f32.mrf.mxu0
    %2305 = vmatprep.mubr.bf16.mxu0 0
    %2306 = vmatmul.mubr.bf16.gmra.mxu0 %v2010
    %v2307 = vpop.f32.mrf.mxu0
    %v2308 = vadd.f32 %v2038, %v2307
    %v2309 = vpop.f32.mrf.mxu0
    %v2310 = vpop.f32.mrf.mxu0
    %v2311 = vadd.f32 %v2038, %v2310
    %v2312 = vpop.f32.mrf.mxu0
    %2313 = vmatprep.mubr.bf16.mxu0 0
    %2314 = vmatmul.mubr.bf16.gmra.mxu0 %v2011
    %v2315 = vpop.f32.mrf.mxu0
    %v2316 = vadd.f32 %v2038, %v2315
    %v2317 = vpop.f32.mrf.mxu0
    %v2318 = vpop.f32.mrf.mxu0
    %v2319 = vadd.f32 %v2038, %v2318
    %v2320 = vpop.f32.mrf.mxu0
    %2321 = vmatprep.mubr.bf16.mxu0 0
    %2322 = vmatmul.mubr.bf16.gmra.mxu0 %v2012
    %v2323 = vpop.f32.mrf.mxu0
    %v2324 = vadd.f32 %v2038, %v2323
    %v2325 = vpop.f32.mrf.mxu0
    %v2326 = vpop.f32.mrf.mxu0
    %v2327 = vadd.f32 %v2038, %v2326
    %v2328 = vpop.f32.mrf.mxu0
    %2329 = vmatprep.mubr.bf16.mxu0 0
    %2330 = vmatmul.mubr.bf16.gmra.mxu0 %v2013
    %v2331 = vpop.f32.mrf.mxu0
    %v2332 = vadd.f32 %v2038, %v2331
    %v2333 = vpop.f32.mrf.mxu0
    %v2334 = vpop.f32.mrf.mxu0
    %v2335 = vadd.f32 %v2038, %v2334
    %v2336 = vpop.f32.mrf.mxu0
    %2337 = vmatprep.mubr.bf16.mxu0 0
    %2338 = vmatmul.mubr.bf16.gmra.mxu0 %v2014
    %v2339 = vpop.f32.mrf.mxu0
    %v2340 = vadd.f32 %v2038, %v2339
    %v2341 = vpop.f32.mrf.mxu0
    %v2342 = vpop.f32.mrf.mxu0
    %v2343 = vadd.f32 %v2038, %v2342
    %v2344 = vpop.f32.mrf.mxu0
    %2345 = vmatprep.mubr.bf16.mxu0 0
    %2346 = vmatmul.mubr.bf16.gmra.mxu0 %v2015
    %v2347 = vpop.f32.mrf.mxu0
    %v2348 = vadd.f32 %v2038, %v2347
    %v2349 = vpop.f32.mrf.mxu0
    %v2350 = vpop.f32.mrf.mxu0
    %v2351 = vadd.f32 %v2038, %v2350
    %v2352 = vpop.f32.mrf.mxu0
    %2353 = vmatprep.mubr.bf16.mxu0 0
    %2354 = vmatmul.mubr.bf16.gmra.mxu0 %v2016
    %v2355 = vpop.f32.mrf.mxu0
    %v2356 = vadd.f32 %v2038, %v2355
    %v2357 = vpop.f32.mrf.mxu0
    %v2358 = vpop.f32.mrf.mxu0
    %v2359 = vadd.f32 %v2038, %v2358
    %v2360 = vpop.f32.mrf.mxu0
    %2361 = vdwg.mxu0
    %v2362 = vpack.c.bf16 %v2303, %v2300
    %v2363 = vpack.c.bf16 %v2311, %v2308
    %v2364 = vpack.c.bf16 %v2319, %v2316
    %v2365 = vpack.c.bf16 %v2327, %v2324
    %v2366 = vpack.c.bf16 %v2335, %v2332
    %v2367 = vpack.c.bf16 %v2343, %v2340
    %v2368 = vpack.c.bf16 %v2351, %v2348
    %v2369 = vpack.c.bf16 %v2359, %v2356
    %v2378 = vunpack.c.l.b16 %v2362
    %v2379 = vunpack.c.h.b16 %v2362
    %v2380 = vunpack.c.l.b16 %v2363
    %v2381 = vunpack.c.h.b16 %v2363
    %v2382 = vunpack.c.l.b16 %v2364
    %v2383 = vunpack.c.h.b16 %v2364
    %v2384 = vunpack.c.l.b16 %v2365
    %v2385 = vunpack.c.h.b16 %v2365
    %v2386 = vunpack.c.l.b16 %v2366
    %v2387 = vunpack.c.h.b16 %v2366
    %v2388 = vunpack.c.l.b16 %v2367
    %v2389 = vunpack.c.h.b16 %v2367
    %v2390 = vunpack.c.l.b16 %v2368
    %v2391 = vunpack.c.h.b16 %v2368
    %v2392 = vunpack.c.l.b16 %v2369
    %v2393 = vunpack.c.h.b16 %v2369
    %v2394 = vpack.c.b16 %v2378, %v2378
    %v2395 = vpack.c.b16 %v2379, %v2379
    %v2396 = vpack.c.b16 %v2380, %v2380
    %v2397 = vpack.c.b16 %v2381, %v2381
    %v2398 = vpack.c.b16 %v2382, %v2382
    %v2399 = vpack.c.b16 %v2383, %v2383
    %v2400 = vpack.c.b16 %v2384, %v2384
    %v2401 = vpack.c.b16 %v2385, %v2385
    %v2402 = vpack.c.b16 %v2386, %v2386
    %v2403 = vpack.c.b16 %v2387, %v2387
    %v2404 = vpack.c.b16 %v2388, %v2388
    %v2405 = vpack.c.b16 %v2389, %v2389
    %v2406 = vpack.c.b16 %v2390, %v2390
    %v2407 = vpack.c.b16 %v2391, %v2391
    %v2408 = vpack.c.b16 %v2392, %v2392
    %v2409 = vpack.c.b16 %v2393, %v2393
    %2426 = vst [vmem:[#allocation15 + $0x40] sm:$0xf] %v2394
    %2427 = vst [vmem:[#allocation15 + $0x44] sm:$0xf] %v2395
    %2428 = vst [vmem:[#allocation15 + $0x48] sm:$0xf] %v2396
    %2429 = vst [vmem:[#allocation15 + $0x4c] sm:$0xf] %v2397
    %2430 = vst [vmem:[#allocation15 + $0x50] sm:$0xf] %v2398
    %2431 = vst [vmem:[#allocation15 + $0x54] sm:$0xf] %v2399
    %2432 = vst [vmem:[#allocation15 + $0x58] sm:$0xf] %v2400
    %2433 = vst [vmem:[#allocation15 + $0x5c] sm:$0xf] %v2401
    %2434 = vst [vmem:[#allocation15 + $0x60] sm:$0xf] %v2402
    %2435 = vst [vmem:[#allocation15 + $0x64] sm:$0xf] %v2403
    %2436 = vst [vmem:[#allocation15 + $0x68] sm:$0xf] %v2404
    %2437 = vst [vmem:[#allocation15 + $0x6c] sm:$0xf] %v2405
    %2438 = vst [vmem:[#allocation15 + $0x70] sm:$0xf] %v2406
    %2439 = vst [vmem:[#allocation15 + $0x74] sm:$0xf] %v2407
    %2440 = vst [vmem:[#allocation15 + $0x78] sm:$0xf] %v2408
    %2441 = vst [vmem:[#allocation15 + $0x7c] sm:$0xf] %v2409
    // Predicated region
    $region62: #{tpu_custom_call.1} parent=1 // pred_check
      _
    $region63: #{tpu_custom_call.1} parent=1 // pred_check_branch
      %2443 = sbr.rel (0) target = $region65
    $region64: #{tpu_custom_call.1} parent=1 // pred_region
      %s2445 = ssub.s32 2048, 2048
      %2446 = vsyncadd [#allocation6], %s2445
      %s2447 = sshll.u32 [#allocation15], 4
      %s2448 = int_to_ptr.vmem [resolvable:$true] %s2447
      %2453 = dma.vmem_to_hbm [thread:$0]  %s2448, 2048, %s9, [#allocation6], 64, 64, 4
    $region65: #{tpu_custom_call.1} parent=1 // pred_fallthru
      _
    // Predicated region
    $region66: #{tpu_custom_call.1} parent=1 // pred_check
      _
    $region67: #{tpu_custom_call.1} parent=1 // pred_check_branch
      %2455 = sbr.rel (0) target = $region69
    $region68: #{tpu_custom_call.1} parent=1 // pred_region
      %2456 = dma.done [#allocation6], 2048
    $region69: #{tpu_custom_call.1} parent=1 // pred_fallthru
      _
    %2457 = vsyncpa [#allocation5], 1
    %2458 = vsyncpa [#allocation8], 1
    %2459 = vsyncpa [#allocation11], 1
    %2460 = vsyncpa [#allocation14], 1
    %2461 = vsyncpa [#allocation6], 1

</llo_original>
